<compile_context>
chip_gen: v7x
topology: tpu7x:2x2x1
jax: 0.10.0
libtpu: 0.0.40
codegen_flags: <defaults>
</compile_context>

<pallas_src>
import functools

import jax
import jax.numpy as jnp
from jax import lax
from jax.experimental import pallas as pl
from jax.experimental.pallas import tpu as pltpu

EPS = 1e-5
NEG_SLOPE = 0.2
LANE = 128


def _conv_stats_kernel(x_ref, w_ref, y_ref, stats_ref, *, k, stride, row_tile, w_out):
    """Fused-im2col conv tile (bf16 MXU, f32 acc) + per-channel sum / sum-sq accumulation.

    x_ref:     (1, stride*stride, PH, PW, Cin)  bf16 phase-decomposed padded input (resident)
    w_ref:     (k*k, Cin, Cp)                   bf16 weights, Cout zero-padded to Cp (resident)
    y_ref:     (1, row_tile*w_out, Cp)          f32 un-normalized conv output tile
    stats_ref: (1, 2, Cp)                       f32 [sum, sum_sq] accumulator (resident over t)
    """
    t = pl.program_id(1)
    r0 = t * row_tile
    cin = x_ref.shape[-1]
    cp = w_ref.shape[-1]
    m = row_tile * w_out

    acc = jnp.zeros((m, cp), jnp.float32)
    for kh in range(k):                       # 16 taps, statically unrolled
        ih, ah = kh // stride, kh % stride
        for kw in range(k):
            iw, aw = kw // stride, kw % stride
            xs = x_ref[0, ah * stride + aw,
                       pl.ds(r0 + ih, row_tile),
                       pl.ds(iw, w_out), :]               # (row_tile, w_out, Cin) bf16
            xs = xs.reshape(m, cin)
            acc = acc + jnp.dot(xs, w_ref[kh * k + kw],
                                preferred_element_type=jnp.float32)

    y_ref[0] = acc.astype(y_ref.dtype)

    part = jnp.concatenate(
        [jnp.sum(acc, axis=0, keepdims=True),
         jnp.sum(acc * acc, axis=0, keepdims=True)], axis=0)      # (2, Cp) f32

    @pl.when(t == 0)
    def _init():
        stats_ref[...] = jnp.zeros_like(stats_ref)

    stats_ref[0] = stats_ref[0] + part


def _norm_act_kernel(y_ref, stats_ref, o_ref, *, hw):
    """InstanceNorm (biased variance, eps=1e-5) + LeakyReLU(0.2) on one conv-output tile."""
    y = y_ref[0]                                     # (m, Cp) f32
    inv_hw = 1.0 / float(hw)
    mean = stats_ref[0, 0:1, :] * inv_hw             # (1, Cp)
    ex2 = stats_ref[0, 1:2, :] * inv_hw
    var = jnp.maximum(ex2 - mean * mean, 0.0)        # guard tiny negative rounding
    inv_std = lax.rsqrt(var + EPS)                   # EUP
    yn = (y - mean) * inv_std
    o_ref[0] = jnp.where(yn >= 0, yn, NEG_SLOPE * yn).astype(o_ref.dtype)


def _choose_row_tile(h_out, w_out, requested):
    """Largest divisor of h_out <= requested whose tile (rows*w_out) is sublane aligned."""
    for tr in range(min(requested, h_out), 0, -1):
        if h_out % tr == 0 and (tr * w_out) % 8 == 0:
            return tr
    return h_out   # single tile: block equals full spatial extent (always legal)


def _phase_decompose(x_nhwc, k, stride):
    """Reflect-pad (pad=1) and split into stride*stride phase grids (~1x input bytes)."""
    n, h, w, c = x_nhwc.shape
    xp = jnp.pad(x_nhwc, ((0, 0), (1, 1), (1, 1), (0, 0)), mode="reflect")
    hp, wp = h + 2, w + 2
    h_out = (hp - k) // stride + 1
    w_out = (wp - k) // stride + 1
    pad_h = (-hp) % stride
    pad_w = (-wp) % stride
    if pad_h or pad_w:
        xp = jnp.pad(xp, ((0, 0), (0, pad_h), (0, pad_w), (0, 0)))
    ph, pw = (hp + pad_h) // stride, (wp + pad_w) // stride
    # phases[n, a*stride + b, i, j, c] == xp[n, i*stride + a, j*stride + b, c]
    phases = xp.reshape(n, ph, stride, pw, stride, c)
    phases = jnp.transpose(phases, (0, 2, 4, 1, 3, 5)).reshape(n, stride * stride, ph, pw, c)
    return phases, h_out, w_out


def conv_block_nhwc(x_nhwc, weight, *, stride, row_tile=8):
    """ConvBlock forward, channels-last (perf path): (N,H,W,Cin) -> (N,Ho,Wo,Cout)."""
    n, h, w, cin = x_nhwc.shape
    cout, cin_w, k, _ = weight.shape
    assert cin_w == cin

    phases, h_out, w_out = _phase_decompose(x_nhwc.astype(jnp.bfloat16), k, stride)
    ph, pw = phases.shape[2], phases.shape[3]
    assert ph >= h_out + (k - 1) // stride and pw >= w_out + (k - 1) // stride

    cp = ((cout + LANE - 1) // LANE) * LANE            # lane-dense (padded) channel dim
    tr = _choose_row_tile(h_out, w_out, row_tile)
    nt = h_out // tr
    m_tile = tr * w_out
    hw = h_out * w_out

    # (Cout, Cin, k, k) -> (k*k, Cin, Cp), Cout zero-padded, bf16 for the MXU.
    w_r = jnp.transpose(weight, (2, 3, 1, 0)).reshape(k * k, cin, cout)
    w_r = jnp.pad(w_r, ((0, 0), (0, 0), (0, cp - cout))).astype(jnp.bfloat16)

    # Pass 1: conv tiles + per-channel [sum, sum_sq] accumulated across the HW-tile axis.
    conv_kernel = functools.partial(
        _conv_stats_kernel, k=k, stride=stride, row_tile=tr, w_out=w_out)
    y_flat, stats = pl.pallas_call(
        conv_kernel,
        out_shape=(jax.ShapeDtypeStruct((n, hw, cp), jnp.float32),
                   jax.ShapeDtypeStruct((n, 2, cp), jnp.float32)),
        grid_spec=pltpu.PrefetchScalarGridSpec(
            num_scalar_prefetch=0,
            grid=(n, nt),
            in_specs=[
                pl.BlockSpec((1, stride * stride, ph, pw, cin),
                             lambda b, t: (b, 0, 0, 0, 0)),
                pl.BlockSpec((k * k, cin, cp), lambda b, t: (0, 0, 0)),
            ],
            out_specs=(
                pl.BlockSpec((1, m_tile, cp), lambda b, t: (b, t, 0)),
                pl.BlockSpec((1, 2, cp), lambda b, t: (b, 0, 0)),
            ),
        ),
        compiler_params=pltpu.CompilerParams(
            dimension_semantics=("parallel", "arbitrary")),
    )(phases, w_r)

    # Pass 2: normalize + LeakyReLU each tile with the finished per-image stats.
    norm_kernel = functools.partial(_norm_act_kernel, hw=hw)
    out_flat = pl.pallas_call(
        norm_kernel,
        out_shape=jax.ShapeDtypeStruct((n, hw, cp), jnp.float32),
        grid_spec=pltpu.PrefetchScalarGridSpec(
            num_scalar_prefetch=0,
            grid=(n, nt),
            in_specs=[
                pl.BlockSpec((1, m_tile, cp), lambda b, t: (b, t, 0)),
                pl.BlockSpec((1, 2, cp), lambda b, t: (b, 0, 0)),
            ],
            out_specs=pl.BlockSpec((1, m_tile, cp), lambda b, t: (b, t, 0)),
        ),
        compiler_params=pltpu.CompilerParams(
            dimension_semantics=("parallel", "parallel")),
    )(y_flat, stats)

    return out_flat.reshape(n, h_out, w_out, cp)[..., :cout]


@functools.partial(jax.jit, static_argnames=("stride", "row_tile"))
def conv_block(x, weight, bias=None, *, stride, row_tile=8):
    """Drop-in NCHW wrapper matching the PyTorch module: (N,Cin,H,W) -> (N,Cout,Ho,Wo).

    `bias` is accepted for API parity but unused: InstanceNorm2d(affine=False)
    subtracts the per-channel mean, so the Conv2d bias cancels exactly.
    """
    del bias
    x_nhwc = jnp.transpose(x, (0, 2, 3, 1))
    out_nhwc = conv_block_nhwc(x_nhwc, weight, stride=stride, row_tile=row_tile)
    return jnp.transpose(out_nhwc, (0, 3, 1, 2))


def _reference(x, weight, bias, stride):
    """Pure-JAX f32 reference (reflect-pad conv WITH bias + instance norm + leaky relu)."""
    xp = jnp.pad(x, ((0, 0), (0, 0), (1, 1), (1, 1)), mode="reflect")
    y = lax.conv_general_dilated(
        xp, weight, window_strides=(stride, stride), padding="VALID",
        dimension_numbers=("NCHW", "OIHW", "NCHW"))
    y = y + bias.reshape(1, -1, 1, 1)
    mean = jnp.mean(y, axis=(2, 3), keepdims=True)
    var = jnp.mean((y - mean) ** 2, axis=(2, 3), keepdims=True)
    yn = (y - mean) / jnp.sqrt(var + EPS)
    return jnp.where(yn >= 0, yn, NEG_SLOPE * yn)


if __name__ == "__main__":
    key = jax.random.PRNGKey(0)
    kx, kw, kb = jax.random.split(key, 3)

    N, CIN, COUT, H, W = 2, 4, 8, 16, 16
    STRIDE = 2
    K = 4

    x = jax.random.normal(kx, (N, CIN, H, W), dtype=jnp.float32)
    fan_in = CIN * K * K
    weight = jax.random.normal(kw, (COUT, CIN, K, K), dtype=jnp.float32) / jnp.sqrt(fan_in)
    bias = jax.random.normal(kb, (COUT,), dtype=jnp.float32) * 0.01

    # Pre-round operands to bf16 so the f32 reference sees exactly what the bf16
    # MXU kernel consumes (the bias stays f32 — it cancels under InstanceNorm).
    x = x.astype(jnp.bfloat16).astype(jnp.float32)
    weight = weight.astype(jnp.bfloat16).astype(jnp.float32)

    # row_tile=4 -> 2 spatial tiles per image: exercises the two-pass
    # (sum / sum-sq accumulation) InstanceNorm path.
    out = conv_block(x, weight, bias, stride=STRIDE, row_tile=4)
    out = jax.block_until_ready(out)

    ref = _reference(x, weight, bias, STRIDE)
    assert out.shape == ref.shape == (N, COUT, H // STRIDE, W // STRIDE)
    assert jnp.allclose(out, ref, atol=2e-3, rtol=2e-3), float(jnp.max(jnp.abs(out - ref)))

    print("KERNEL_OK")
</pallas_src>

<mosaic_0001>
module attributes {stable_mosaic.version = 11 : i64} {
  func.func @_norm_act_kernel(%arg0: i32, %arg1: i32, %arg2: memref<1x32x128xf32, #tpu.memory_space<vmem>>, %arg3: memref<1x2x128xf32, #tpu.memory_space<vmem>>, %arg4: memref<1x32x128xf32, #tpu.memory_space<vmem>>) attributes {dimension_semantics = [#tpu.dimension_semantics<parallel>, #tpu.dimension_semantics<parallel>], iteration_bounds = array<i64: 2, 2>, scalar_prefetch = 0 : i64, scratch_operands = 0 : i64, tpu.core_type = #tpu.core_type<tc>, window_params = [{transform_indices = @transform_0, window_bounds = array<i64: 1, 32, 128>}, {transform_indices = @transform_1, window_bounds = array<i64: 1, 2, 128>}, {transform_indices = @transform_2, window_bounds = array<i64: 1, 32, 128>}]} {
    %c0 = arith.constant 0 : index
    %c0_0 = arith.constant 0 : index
    %c0_1 = arith.constant 0 : index
    %0 = vector.load %arg2[%c0, %c0_0, %c0_1] : memref<1x32x128xf32, #tpu.memory_space<vmem>>, vector<1x32x128xf32>
    %1 = vector.shape_cast %0 : vector<1x32x128xf32> to vector<32x128xf32>
    %c0_2 = arith.constant 0 : index
    %c0_3 = arith.constant 0 : index
    %c0_4 = arith.constant 0 : index
    %2 = vector.load %arg3[%c0_2, %c0_3, %c0_4] : memref<1x2x128xf32, #tpu.memory_space<vmem>>, vector<1x1x128xf32>
    %3 = vector.shape_cast %2 : vector<1x1x128xf32> to vector<1x128xf32>
    %cst = arith.constant 1.562500e-02 : f32
    %4 = vector.broadcast %cst : f32 to vector<1x128xf32>
    %5 = arith.mulf %3, %4 : vector<1x128xf32>
    %c0_5 = arith.constant 0 : index
    %c1 = arith.constant 1 : index
    %c0_6 = arith.constant 0 : index
    %6 = vector.load %arg3[%c0_5, %c1, %c0_6] : memref<1x2x128xf32, #tpu.memory_space<vmem>>, vector<1x1x128xf32>
    %7 = vector.shape_cast %6 : vector<1x1x128xf32> to vector<1x128xf32>
    %cst_7 = arith.constant 1.562500e-02 : f32
    %8 = vector.broadcast %cst_7 : f32 to vector<1x128xf32>
    %9 = arith.mulf %7, %8 : vector<1x128xf32>
    %10 = arith.mulf %5, %5 : vector<1x128xf32>
    %11 = arith.subf %9, %10 : vector<1x128xf32>
    %cst_8 = arith.constant 0.000000e+00 : f32
    %12 = vector.broadcast %cst_8 : f32 to vector<1x128xf32>
    %13 = arith.maximumf %11, %12 : vector<1x128xf32>
    %cst_9 = arith.constant 9.99999974E-6 : f32
    %14 = vector.broadcast %cst_9 : f32 to vector<1x128xf32>
    %15 = arith.addf %13, %14 : vector<1x128xf32>
    %16 = math.rsqrt %15 : vector<1x128xf32>
    %17 = vector.broadcast %5 : vector<1x128xf32> to vector<32x128xf32>
    %18 = arith.subf %1, %17 : vector<32x128xf32>
    %19 = vector.broadcast %16 : vector<1x128xf32> to vector<32x128xf32>
    %20 = arith.mulf %18, %19 : vector<32x128xf32>
    %cst_10 = arith.constant 0.000000e+00 : f32
    %21 = vector.broadcast %cst_10 : f32 to vector<32x128xf32>
    %22 = arith.cmpf oge, %20, %21 : vector<32x128xf32>
    %cst_11 = arith.constant 2.000000e-01 : f32
    %23 = vector.broadcast %cst_11 : f32 to vector<32x128xf32>
    %24 = arith.mulf %23, %20 : vector<32x128xf32>
    %25 = arith.select %22, %20, %24 : vector<32x128xi1>, vector<32x128xf32>
    %c0_12 = arith.constant 0 : index
    %c0_13 = arith.constant 0 : index
    %c0_14 = arith.constant 0 : index
    %26 = vector.load %arg4[%c0_12, %c0_13, %c0_14] : memref<1x32x128xf32, #tpu.memory_space<vmem>>, vector<1x32x128xf32>
    %27 = vector.shape_cast %26 : vector<1x32x128xf32> to vector<32x128xf32>
    %28 = vector.shape_cast %25 : vector<32x128xf32> to vector<1x32x128xf32>
    tpu.vector_store %arg4[%c0_12, %c0_13, %c0_14], %28 {strides = array<i32>} : memref<1x32x128xf32, #tpu.memory_space<vmem>>, vector<1x32x128xf32>,
    return
  }
  func.func @transform_0(%arg0: i32, %arg1: i32) -> (i32, i32, i32) {
    %c0_i32 = arith.constant 0 : i32
    %c0_i32_0 = arith.constant 0 : i32
    return %arg0, %arg1, %c0_i32 : i32, i32, i32
  }
  func.func @transform_1(%arg0: i32, %arg1: i32) -> (i32, i32, i32) {
    %c0_i32 = arith.constant 0 : i32
    %c0_i32_0 = arith.constant 0 : i32
    %c0_i32_1 = arith.constant 0 : i32
    return %arg0, %c0_i32, %c0_i32_0 : i32, i32, i32
  }
  func.func @transform_2(%arg0: i32, %arg1: i32) -> (i32, i32, i32) {
    %c0_i32 = arith.constant 0 : i32
    %c0_i32_0 = arith.constant 0 : i32
    return %arg0, %arg1, %c0_i32 : i32, i32, i32
  }
}

module attributes {stable_mosaic.version = 11 : i64} {
  func.func @_conv_stats_kernel(%arg0: i32, %arg1: i32, %arg2: memref<1x4x9x9x4xbf16, #tpu.memory_space<vmem>>, %arg3: memref<16x4x128xbf16, #tpu.memory_space<vmem>>, %arg4: memref<1x32x128xf32, #tpu.memory_space<vmem>>, %arg5: memref<1x2x128xf32, #tpu.memory_space<vmem>>) attributes {dimension_semantics = [#tpu.dimension_semantics<parallel>, #tpu.dimension_semantics<arbitrary>], iteration_bounds = array<i64: 2, 2>, scalar_prefetch = 0 : i64, scratch_operands = 0 : i64, tpu.core_type = #tpu.core_type<tc>, window_params = [{transform_indices = @transform_0, window_bounds = array<i64: 1, 4, 9, 9, 4>}, {pipeline_mode = #tpu.pipeline_mode<synchronous>, transform_indices = @transform_1, window_bounds = array<i64: 16, 4, 128>}, {transform_indices = @transform_2, window_bounds = array<i64: 1, 32, 128>}, {transform_indices = @transform_3, window_bounds = array<i64: 1, 2, 128>}]} {
    %c4_i32 = arith.constant 4 : i32
    %0 = arith.muli %arg1, %c4_i32 : i32
    %cst = arith.constant 0.000000e+00 : f32
    %1 = vector.broadcast %cst : f32 to vector<32x128xf32>
    %c0_i32 = arith.constant 0 : i32
    %2 = arith.addi %0, %c0_i32 : i32
    %c0 = arith.constant 0 : index
    %c0_0 = arith.constant 0 : index
    %3 = arith.index_cast %2 : i32 to index
    %c0_1 = arith.constant 0 : index
    %c0_2 = arith.constant 0 : index
    %4 = vector.load %arg2[%c0, %c0_0, %3, %c0_1, %c0_2] : memref<1x4x9x9x4xbf16, #tpu.memory_space<vmem>>, vector<1x1x4x8x4xbf16>
    %5 = vector.shape_cast %4 : vector<1x1x4x8x4xbf16> to vector<4x8x4xbf16>
    %6 = vector.shape_cast %5 : vector<4x8x4xbf16> to vector<32x4xbf16>
    %c0_3 = arith.constant 0 : index
    %c0_4 = arith.constant 0 : index
    %c0_5 = arith.constant 0 : index
    %7 = vector.load %arg3[%c0_3, %c0_4, %c0_5] : memref<16x4x128xbf16, #tpu.memory_space<vmem>>, vector<1x4x128xbf16>
    %8 = vector.shape_cast %7 : vector<1x4x128xbf16> to vector<4x128xbf16>
    %cst_6 = arith.constant dense<0.000000e+00> : vector<32x128xf32>
    %9 = tpu.matmul %6, %8, %cst_6 {dimension_numbers = #tpu.dot_dimension_numbers<[1], [0], [0], [1], [0, 0, 1, 1], [], []>} : vector<32x4xbf16>, vector<4x128xbf16>, vector<32x128xf32> -> vector<32x128xf32>
    %10 = arith.addf %1, %9 : vector<32x128xf32>
    %c0_i32_7 = arith.constant 0 : i32
    %11 = arith.addi %0, %c0_i32_7 : i32
    %c0_8 = arith.constant 0 : index
    %c1 = arith.constant 1 : index
    %12 = arith.index_cast %11 : i32 to index
    %c0_9 = arith.constant 0 : index
    %c0_10 = arith.constant 0 : index
    %13 = vector.load %arg2[%c0_8, %c1, %12, %c0_9, %c0_10] : memref<1x4x9x9x4xbf16, #tpu.memory_space<vmem>>, vector<1x1x4x8x4xbf16>
    %14 = vector.shape_cast %13 : vector<1x1x4x8x4xbf16> to vector<4x8x4xbf16>
    %15 = vector.shape_cast %14 : vector<4x8x4xbf16> to vector<32x4xbf16>
    %c1_11 = arith.constant 1 : index
    %c0_12 = arith.constant 0 : index
    %c0_13 = arith.constant 0 : index
    %16 = vector.load %arg3[%c1_11, %c0_12, %c0_13] : memref<16x4x128xbf16, #tpu.memory_space<vmem>>, vector<1x4x128xbf16>
    %17 = vector.shape_cast %16 : vector<1x4x128xbf16> to vector<4x128xbf16>
    %cst_14 = arith.constant dense<0.000000e+00> : vector<32x128xf32>
    %18 = tpu.matmul %15, %17, %cst_14 {dimension_numbers = #tpu.dot_dimension_numbers<[1], [0], [0], [1], [0, 0, 1, 1], [], []>} : vector<32x4xbf16>, vector<4x128xbf16>, vector<32x128xf32> -> vector<32x128xf32>
    %19 = arith.addf %10, %18 : vector<32x128xf32>
    %c0_i32_15 = arith.constant 0 : i32
    %20 = arith.addi %0, %c0_i32_15 : i32
    %c0_16 = arith.constant 0 : index
    %c0_17 = arith.constant 0 : index
    %21 = arith.index_cast %20 : i32 to index
    %c1_18 = arith.constant 1 : index
    %c0_19 = arith.constant 0 : index
    %22 = vector.load %arg2[%c0_16, %c0_17, %21, %c1_18, %c0_19] : memref<1x4x9x9x4xbf16, #tpu.memory_space<vmem>>, vector<1x1x4x8x4xbf16>
    %23 = vector.shape_cast %22 : vector<1x1x4x8x4xbf16> to vector<4x8x4xbf16>
    %24 = vector.shape_cast %23 : vector<4x8x4xbf16> to vector<32x4xbf16>
    %c2 = arith.constant 2 : index
    %c0_20 = arith.constant 0 : index
    %c0_21 = arith.constant 0 : index
    %25 = vector.load %arg3[%c2, %c0_20, %c0_21] : memref<16x4x128xbf16, #tpu.memory_space<vmem>>, vector<1x4x128xbf16>
    %26 = vector.shape_cast %25 : vector<1x4x128xbf16> to vector<4x128xbf16>
    %cst_22 = arith.constant dense<0.000000e+00> : vector<32x128xf32>
    %27 = tpu.matmul %24, %26, %cst_22 {dimension_numbers = #tpu.dot_dimension_numbers<[1], [0], [0], [1], [0, 0, 1, 1], [], []>} : vector<32x4xbf16>, vector<4x128xbf16>, vector<32x128xf32> -> vector<32x128xf32>
    %28 = arith.addf %19, %27 : vector<32x128xf32>
    %c0_i32_23 = arith.constant 0 : i32
    %29 = arith.addi %0, %c0_i32_23 : i32
    %c0_24 = arith.constant 0 : index
    %c1_25 = arith.constant 1 : index
    %30 = arith.index_cast %29 : i32 to index
    %c1_26 = arith.constant 1 : index
    %c0_27 = arith.constant 0 : index
    %31 = vector.load %arg2[%c0_24, %c1_25, %30, %c1_26, %c0_27] : memref<1x4x9x9x4xbf16, #tpu.memory_space<vmem>>, vector<1x1x4x8x4xbf16>
    %32 = vector.shape_cast %31 : vector<1x1x4x8x4xbf16> to vector<4x8x4xbf16>
    %33 = vector.shape_cast %32 : vector<4x8x4xbf16> to vector<32x4xbf16>
    %c3 = arith.constant 3 : index
    %c0_28 = arith.constant 0 : index
    %c0_29 = arith.constant 0 : index
    %34 = vector.load %arg3[%c3, %c0_28, %c0_29] : memref<16x4x128xbf16, #tpu.memory_space<vmem>>, vector<1x4x128xbf16>
    %35 = vector.shape_cast %34 : vector<1x4x128xbf16> to vector<4x128xbf16>
    %cst_30 = arith.constant dense<0.000000e+00> : vector<32x128xf32>
    %36 = tpu.matmul %33, %35, %cst_30 {dimension_numbers = #tpu.dot_dimension_numbers<[1], [0], [0], [1], [0, 0, 1, 1], [], []>} : vector<32x4xbf16>, vector<4x128xbf16>, vector<32x128xf32> -> vector<32x128xf32>
    %37 = arith.addf %28, %36 : vector<32x128xf32>
    %c0_i32_31 = arith.constant 0 : i32
    %38 = arith.addi %0, %c0_i32_31 : i32
    %c0_32 = arith.constant 0 : index
    %c2_33 = arith.constant 2 : index
    %39 = arith.index_cast %38 : i32 to index
    %c0_34 = arith.constant 0 : index
    %c0_35 = arith.constant 0 : index
    %40 = vector.load %arg2[%c0_32, %c2_33, %39, %c0_34, %c0_35] : memref<1x4x9x9x4xbf16, #tpu.memory_space<vmem>>, vector<1x1x4x8x4xbf16>
    %41 = vector.shape_cast %40 : vector<1x1x4x8x4xbf16> to vector<4x8x4xbf16>
    %42 = vector.shape_cast %41 : vector<4x8x4xbf16> to vector<32x4xbf16>
    %c4 = arith.constant 4 : index
    %c0_36 = arith.constant 0 : index
    %c0_37 = arith.constant 0 : index
    %43 = vector.load %arg3[%c4, %c0_36, %c0_37] : memref<16x4x128xbf16, #tpu.memory_space<vmem>>, vector<1x4x128xbf16>
    %44 = vector.shape_cast %43 : vector<1x4x128xbf16> to vector<4x128xbf16>
    %cst_38 = arith.constant dense<0.000000e+00> : vector<32x128xf32>
    %45 = tpu.matmul %42, %44, %cst_38 {dimension_numbers = #tpu.dot_dimension_numbers<[1], [0], [0], [1], [0, 0, 1, 1], [], []>} : vector<32x4xbf16>, vector<4x128xbf16>, vector<32x128xf32> -> vector<32x128xf32>
    %46 = arith.addf %37, %45 : vector<32x128xf32>
    %c0_i32_39 = arith.constant 0 : i32
    %47 = arith.addi %0, %c0_i32_39 : i32
    %c0_40 = arith.constant 0 : index
    %c3_41 = arith.constant 3 : index
    %48 = arith.index_cast %47 : i32 to index
    %c0_42 = arith.constant 0 : index
    %c0_43 = arith.constant 0 : index
    %49 = vector.load %arg2[%c0_40, %c3_41, %48, %c0_42, %c0_43] : memref<1x4x9x9x4xbf16, #tpu.memory_space<vmem>>, vector<1x1x4x8x4xbf16>
    %50 = vector.shape_cast %49 : vector<1x1x4x8x4xbf16> to vector<4x8x4xbf16>
    %51 = vector.shape_cast %50 : vector<4x8x4xbf16> to vector<32x4xbf16>
    %c5 = arith.constant 5 : index
    %c0_44 = arith.constant 0 : index
    %c0_45 = arith.constant 0 : index
    %52 = vector.load %arg3[%c5, %c0_44, %c0_45] : memref<16x4x128xbf16, #tpu.memory_space<vmem>>, vector<1x4x128xbf16>
    %53 = vector.shape_cast %52 : vector<1x4x128xbf16> to vector<4x128xbf16>
    %cst_46 = arith.constant dense<0.000000e+00> : vector<32x128xf32>
    %54 = tpu.matmul %51, %53, %cst_46 {dimension_numbers = #tpu.dot_dimension_numbers<[1], [0], [0], [1], [0, 0, 1, 1], [], []>} : vector<32x4xbf16>, vector<4x128xbf16>, vector<32x128xf32> -> vector<32x128xf32>
    %55 = arith.addf %46, %54 : vector<32x128xf32>
    %c0_i32_47 = arith.constant 0 : i32
    %56 = arith.addi %0, %c0_i32_47 : i32
    %c0_48 = arith.constant 0 : index
    %c2_49 = arith.constant 2 : index
    %57 = arith.index_cast %56 : i32 to index
    %c1_50 = arith.constant 1 : index
    %c0_51 = arith.constant 0 : index
    %58 = vector.load %arg2[%c0_48, %c2_49, %57, %c1_50, %c0_51] : memref<1x4x9x9x4xbf16, #tpu.memory_space<vmem>>, vector<1x1x4x8x4xbf16>
    %59 = vector.shape_cast %58 : vector<1x1x4x8x4xbf16> to vector<4x8x4xbf16>
    %60 = vector.shape_cast %59 : vector<4x8x4xbf16> to vector<32x4xbf16>
    %c6 = arith.constant 6 : index
    %c0_52 = arith.constant 0 : index
    %c0_53 = arith.constant 0 : index
    %61 = vector.load %arg3[%c6, %c0_52, %c0_53] : memref<16x4x128xbf16, #tpu.memory_space<vmem>>, vector<1x4x128xbf16>
    %62 = vector.shape_cast %61 : vector<1x4x128xbf16> to vector<4x128xbf16>
    %cst_54 = arith.constant dense<0.000000e+00> : vector<32x128xf32>
    %63 = tpu.matmul %60, %62, %cst_54 {dimension_numbers = #tpu.dot_dimension_numbers<[1], [0], [0], [1], [0, 0, 1, 1], [], []>} : vector<32x4xbf16>, vector<4x128xbf16>, vector<32x128xf32> -> vector<32x128xf32>
    %64 = arith.addf %55, %63 : vector<32x128xf32>
    %c0_i32_55 = arith.constant 0 : i32
    %65 = arith.addi %0, %c0_i32_55 : i32
    %c0_56 = arith.constant 0 : index
    %c3_57 = arith.constant 3 : index
    %66 = arith.index_cast %65 : i32 to index
    %c1_58 = arith.constant 1 : index
    %c0_59 = arith.constant 0 : index
    %67 = vector.load %arg2[%c0_56, %c3_57, %66, %c1_58, %c0_59] : memref<1x4x9x9x4xbf16, #tpu.memory_space<vmem>>, vector<1x1x4x8x4xbf16>
    %68 = vector.shape_cast %67 : vector<1x1x4x8x4xbf16> to vector<4x8x4xbf16>
    %69 = vector.shape_cast %68 : vector<4x8x4xbf16> to vector<32x4xbf16>
    %c7 = arith.constant 7 : index
    %c0_60 = arith.constant 0 : index
    %c0_61 = arith.constant 0 : index
    %70 = vector.load %arg3[%c7, %c0_60, %c0_61] : memref<16x4x128xbf16, #tpu.memory_space<vmem>>, vector<1x4x128xbf16>
    %71 = vector.shape_cast %70 : vector<1x4x128xbf16> to vector<4x128xbf16>
    %cst_62 = arith.constant dense<0.000000e+00> : vector<32x128xf32>
    %72 = tpu.matmul %69, %71, %cst_62 {dimension_numbers = #tpu.dot_dimension_numbers<[1], [0], [0], [1], [0, 0, 1, 1], [], []>} : vector<32x4xbf16>, vector<4x128xbf16>, vector<32x128xf32> -> vector<32x128xf32>
    %73 = arith.addf %64, %72 : vector<32x128xf32>
    %c1_i32 = arith.constant 1 : i32
    %74 = arith.addi %0, %c1_i32 : i32
    %c0_63 = arith.constant 0 : index
    %c0_64 = arith.constant 0 : index
    %75 = arith.index_cast %74 : i32 to index
    %c0_65 = arith.constant 0 : index
    %c0_66 = arith.constant 0 : index
    %76 = vector.load %arg2[%c0_63, %c0_64, %75, %c0_65, %c0_66] : memref<1x4x9x9x4xbf16, #tpu.memory_space<vmem>>, vector<1x1x4x8x4xbf16>
    %77 = vector.shape_cast %76 : vector<1x1x4x8x4xbf16> to vector<4x8x4xbf16>
    %78 = vector.shape_cast %77 : vector<4x8x4xbf16> to vector<32x4xbf16>
    %c8 = arith.constant 8 : index
    %c0_67 = arith.constant 0 : index
    %c0_68 = arith.constant 0 : index
    %79 = vector.load %arg3[%c8, %c0_67, %c0_68] : memref<16x4x128xbf16, #tpu.memory_space<vmem>>, vector<1x4x128xbf16>
    %80 = vector.shape_cast %79 : vector<1x4x128xbf16> to vector<4x128xbf16>
    %cst_69 = arith.constant dense<0.000000e+00> : vector<32x128xf32>
    %81 = tpu.matmul %78, %80, %cst_69 {dimension_numbers = #tpu.dot_dimension_numbers<[1], [0], [0], [1], [0, 0, 1, 1], [], []>} : vector<32x4xbf16>, vector<4x128xbf16>, vector<32x128xf32> -> vector<32x128xf32>
    %82 = arith.addf %73, %81 : vector<32x128xf32>
    %c1_i32_70 = arith.constant 1 : i32
    %83 = arith.addi %0, %c1_i32_70 : i32
    %c0_71 = arith.constant 0 : index
    %c1_72 = arith.constant 1 : index
    %84 = arith.index_cast %83 : i32 to index
    %c0_73 = arith.constant 0 : index
    %c0_74 = arith.constant 0 : index
    %85 = vector.load %arg2[%c0_71, %c1_72, %84, %c0_73, %c0_74] : memref<1x4x9x9x4xbf16, #tpu.memory_space<vmem>>, vector<1x1x4x8x4xbf16>
    %86 = vector.shape_cast %85 : vector<1x1x4x8x4xbf16> to vector<4x8x4xbf16>
    %87 = vector.shape_cast %86 : vector<4x8x4xbf16> to vector<32x4xbf16>
    %c9 = arith.constant 9 : index
    %c0_75 = arith.constant 0 : index
    %c0_76 = arith.constant 0 : index
    %88 = vector.load %arg3[%c9, %c0_75, %c0_76] : memref<16x4x128xbf16, #tpu.memory_space<vmem>>, vector<1x4x128xbf16>
    %89 = vector.shape_cast %88 : vector<1x4x128xbf16> to vector<4x128xbf16>
    %cst_77 = arith.constant dense<0.000000e+00> : vector<32x128xf32>
    %90 = tpu.matmul %87, %89, %cst_77 {dimension_numbers = #tpu.dot_dimension_numbers<[1], [0], [0], [1], [0, 0, 1, 1], [], []>} : vector<32x4xbf16>, vector<4x128xbf16>, vector<32x128xf32> -> vector<32x128xf32>
    %91 = arith.addf %82, %90 : vector<32x128xf32>
    %c1_i32_78 = arith.constant 1 : i32
    %92 = arith.addi %0, %c1_i32_78 : i32
    %c0_79 = arith.constant 0 : index
    %c0_80 = arith.constant 0 : index
    %93 = arith.index_cast %92 : i32 to index
    %c1_81 = arith.constant 1 : index
    %c0_82 = arith.constant 0 : index
    %94 = vector.load %arg2[%c0_79, %c0_80, %93, %c1_81, %c0_82] : memref<1x4x9x9x4xbf16, #tpu.memory_space<vmem>>, vector<1x1x4x8x4xbf16>
    %95 = vector.shape_cast %94 : vector<1x1x4x8x4xbf16> to vector<4x8x4xbf16>
    %96 = vector.shape_cast %95 : vector<4x8x4xbf16> to vector<32x4xbf16>
    %c10 = arith.constant 10 : index
    %c0_83 = arith.constant 0 : index
    %c0_84 = arith.constant 0 : index
    %97 = vector.load %arg3[%c10, %c0_83, %c0_84] : memref<16x4x128xbf16, #tpu.memory_space<vmem>>, vector<1x4x128xbf16>
    %98 = vector.shape_cast %97 : vector<1x4x128xbf16> to vector<4x128xbf16>
    %cst_85 = arith.constant dense<0.000000e+00> : vector<32x128xf32>
    %99 = tpu.matmul %96, %98, %cst_85 {dimension_numbers = #tpu.dot_dimension_numbers<[1], [0], [0], [1], [0, 0, 1, 1], [], []>} : vector<32x4xbf16>, vector<4x128xbf16>, vector<32x128xf32> -> vector<32x128xf32>
    %100 = arith.addf %91, %99 : vector<32x128xf32>
    %c1_i32_86 = arith.constant 1 : i32
    %101 = arith.addi %0, %c1_i32_86 : i32
    %c0_87 = arith.constant 0 : index
    %c1_88 = arith.constant 1 : index
    %102 = arith.index_cast %101 : i32 to index
    %c1_89 = arith.constant 1 : index
    %c0_90 = arith.constant 0 : index
    %103 = vector.load %arg2[%c0_87, %c1_88, %102, %c1_89, %c0_90] : memref<1x4x9x9x4xbf16, #tpu.memory_space<vmem>>, vector<1x1x4x8x4xbf16>
    %104 = vector.shape_cast %103 : vector<1x1x4x8x4xbf16> to vector<4x8x4xbf16>
    %105 = vector.shape_cast %104 : vector<4x8x4xbf16> to vector<32x4xbf16>
    %c11 = arith.constant 11 : index
    %c0_91 = arith.constant 0 : index
    %c0_92 = arith.constant 0 : index
    %106 = vector.load %arg3[%c11, %c0_91, %c0_92] : memref<16x4x128xbf16, #tpu.memory_space<vmem>>, vector<1x4x128xbf16>
    %107 = vector.shape_cast %106 : vector<1x4x128xbf16> to vector<4x128xbf16>
    %cst_93 = arith.constant dense<0.000000e+00> : vector<32x128xf32>
    %108 = tpu.matmul %105, %107, %cst_93 {dimension_numbers = #tpu.dot_dimension_numbers<[1], [0], [0], [1], [0, 0, 1, 1], [], []>} : vector<32x4xbf16>, vector<4x128xbf16>, vector<32x128xf32> -> vector<32x128xf32>
    %109 = arith.addf %100, %108 : vector<32x128xf32>
    %c1_i32_94 = arith.constant 1 : i32
    %110 = arith.addi %0, %c1_i32_94 : i32
    %c0_95 = arith.constant 0 : index
    %c2_96 = arith.constant 2 : index
    %111 = arith.index_cast %110 : i32 to index
    %c0_97 = arith.constant 0 : index
    %c0_98 = arith.constant 0 : index
    %112 = vector.load %arg2[%c0_95, %c2_96, %111, %c0_97, %c0_98] : memref<1x4x9x9x4xbf16, #tpu.memory_space<vmem>>, vector<1x1x4x8x4xbf16>
    %113 = vector.shape_cast %112 : vector<1x1x4x8x4xbf16> to vector<4x8x4xbf16>
    %114 = vector.shape_cast %113 : vector<4x8x4xbf16> to vector<32x4xbf16>
    %c12 = arith.constant 12 : index
    %c0_99 = arith.constant 0 : index
    %c0_100 = arith.constant 0 : index
    %115 = vector.load %arg3[%c12, %c0_99, %c0_100] : memref<16x4x128xbf16, #tpu.memory_space<vmem>>, vector<1x4x128xbf16>
    %116 = vector.shape_cast %115 : vector<1x4x128xbf16> to vector<4x128xbf16>
    %cst_101 = arith.constant dense<0.000000e+00> : vector<32x128xf32>
    %117 = tpu.matmul %114, %116, %cst_101 {dimension_numbers = #tpu.dot_dimension_numbers<[1], [0], [0], [1], [0, 0, 1, 1], [], []>} : vector<32x4xbf16>, vector<4x128xbf16>, vector<32x128xf32> -> vector<32x128xf32>
    %118 = arith.addf %109, %117 : vector<32x128xf32>
    %c1_i32_102 = arith.constant 1 : i32
    %119 = arith.addi %0, %c1_i32_102 : i32
    %c0_103 = arith.constant 0 : index
    %c3_104 = arith.constant 3 : index
    %120 = arith.index_cast %119 : i32 to index
    %c0_105 = arith.constant 0 : index
    %c0_106 = arith.constant 0 : index
    %121 = vector.load %arg2[%c0_103, %c3_104, %120, %c0_105, %c0_106] : memref<1x4x9x9x4xbf16, #tpu.memory_space<vmem>>, vector<1x1x4x8x4xbf16>
    %122 = vector.shape_cast %121 : vector<1x1x4x8x4xbf16> to vector<4x8x4xbf16>
    %123 = vector.shape_cast %122 : vector<4x8x4xbf16> to vector<32x4xbf16>
    %c13 = arith.constant 13 : index
    %c0_107 = arith.constant 0 : index
    %c0_108 = arith.constant 0 : index
    %124 = vector.load %arg3[%c13, %c0_107, %c0_108] : memref<16x4x128xbf16, #tpu.memory_space<vmem>>, vector<1x4x128xbf16>
    %125 = vector.shape_cast %124 : vector<1x4x128xbf16> to vector<4x128xbf16>
    %cst_109 = arith.constant dense<0.000000e+00> : vector<32x128xf32>
    %126 = tpu.matmul %123, %125, %cst_109 {dimension_numbers = #tpu.dot_dimension_numbers<[1], [0], [0], [1], [0, 0, 1, 1], [], []>} : vector<32x4xbf16>, vector<4x128xbf16>, vector<32x128xf32> -> vector<32x128xf32>
    %127 = arith.addf %118, %126 : vector<32x128xf32>
    %c1_i32_110 = arith.constant 1 : i32
    %128 = arith.addi %0, %c1_i32_110 : i32
    %c0_111 = arith.constant 0 : index
    %c2_112 = arith.constant 2 : index
    %129 = arith.index_cast %128 : i32 to index
    %c1_113 = arith.constant 1 : index
    %c0_114 = arith.constant 0 : index
    %130 = vector.load %arg2[%c0_111, %c2_112, %129, %c1_113, %c0_114] : memref<1x4x9x9x4xbf16, #tpu.memory_space<vmem>>, vector<1x1x4x8x4xbf16>
    %131 = vector.shape_cast %130 : vector<1x1x4x8x4xbf16> to vector<4x8x4xbf16>
    %132 = vector.shape_cast %131 : vector<4x8x4xbf16> to vector<32x4xbf16>
    %c14 = arith.constant 14 : index
    %c0_115 = arith.constant 0 : index
    %c0_116 = arith.constant 0 : index
    %133 = vector.load %arg3[%c14, %c0_115, %c0_116] : memref<16x4x128xbf16, #tpu.memory_space<vmem>>, vector<1x4x128xbf16>
    %134 = vector.shape_cast %133 : vector<1x4x128xbf16> to vector<4x128xbf16>
    %cst_117 = arith.constant dense<0.000000e+00> : vector<32x128xf32>
    %135 = tpu.matmul %132, %134, %cst_117 {dimension_numbers = #tpu.dot_dimension_numbers<[1], [0], [0], [1], [0, 0, 1, 1], [], []>} : vector<32x4xbf16>, vector<4x128xbf16>, vector<32x128xf32> -> vector<32x128xf32>
    %136 = arith.addf %127, %135 : vector<32x128xf32>
    %c1_i32_118 = arith.constant 1 : i32
    %137 = arith.addi %0, %c1_i32_118 : i32
    %c0_119 = arith.constant 0 : index
    %c3_120 = arith.constant 3 : index
    %138 = arith.index_cast %137 : i32 to index
    %c1_121 = arith.constant 1 : index
    %c0_122 = arith.constant 0 : index
    %139 = vector.load %arg2[%c0_119, %c3_120, %138, %c1_121, %c0_122] : memref<1x4x9x9x4xbf16, #tpu.memory_space<vmem>>, vector<1x1x4x8x4xbf16>
    %140 = vector.shape_cast %139 : vector<1x1x4x8x4xbf16> to vector<4x8x4xbf16>
    %141 = vector.shape_cast %140 : vector<4x8x4xbf16> to vector<32x4xbf16>
    %c15 = arith.constant 15 : index
    %c0_123 = arith.constant 0 : index
    %c0_124 = arith.constant 0 : index
    %142 = vector.load %arg3[%c15, %c0_123, %c0_124] : memref<16x4x128xbf16, #tpu.memory_space<vmem>>, vector<1x4x128xbf16>
    %143 = vector.shape_cast %142 : vector<1x4x128xbf16> to vector<4x128xbf16>
    %cst_125 = arith.constant dense<0.000000e+00> : vector<32x128xf32>
    %144 = tpu.matmul %141, %143, %cst_125 {dimension_numbers = #tpu.dot_dimension_numbers<[1], [0], [0], [1], [0, 0, 1, 1], [], []>} : vector<32x4xbf16>, vector<4x128xbf16>, vector<32x128xf32> -> vector<32x128xf32>
    %145 = arith.addf %136, %144 : vector<32x128xf32>
    %c0_126 = arith.constant 0 : index
    %c0_127 = arith.constant 0 : index
    %c0_128 = arith.constant 0 : index
    %146 = vector.load %arg4[%c0_126, %c0_127, %c0_128] : memref<1x32x128xf32, #tpu.memory_space<vmem>>, vector<1x32x128xf32>
    %147 = vector.shape_cast %146 : vector<1x32x128xf32> to vector<32x128xf32>
    %148 = vector.shape_cast %145 : vector<32x128xf32> to vector<1x32x128xf32>
    tpu.vector_store %arg4[%c0_126, %c0_127, %c0_128], %148 {strides = array<i32>} : memref<1x32x128xf32, #tpu.memory_space<vmem>>, vector<1x32x128xf32>,
    %cst_129 = arith.constant dense<0.000000e+00> : vector<128xf32>
    %149 = vector.multi_reduction <add>, %145, %cst_129 [0] : vector<32x128xf32> to vector<128xf32>
    %150 = vector.shape_cast %149 : vector<128xf32> to vector<1x128xf32>
    %151 = arith.mulf %145, %145 : vector<32x128xf32>
    %cst_130 = arith.constant dense<0.000000e+00> : vector<128xf32>
    %152 = vector.multi_reduction <add>, %151, %cst_130 [0] : vector<32x128xf32> to vector<128xf32>
    %153 = vector.shape_cast %152 : vector<128xf32> to vector<1x128xf32>
    %154 = tpu.concatenate %150, %153 in 0 : vector<1x128xf32>, vector<1x128xf32> -> vector<2x128xf32>
    %c0_i32_131 = arith.constant 0 : i32
    %155 = arith.cmpi eq, %arg1, %c0_i32_131 : i32
    %156 = arith.extui %155 : i1 to i32
    %c0_i32_132 = arith.constant 0 : i32
    %157 = arith.cmpi ne, %156, %c0_i32_132 : i32
    scf.if %157 {
      %cst_139 = arith.constant 0.000000e+00 : f32
      %164 = vector.broadcast %cst_139 : f32 to vector<1x2x128xf32>
      %c0_140 = arith.constant 0 : index
      %c0_141 = arith.constant 0 : index
      %c0_142 = arith.constant 0 : index
      %165 = vector.load %arg5[%c0_140, %c0_141, %c0_142] : memref<1x2x128xf32, #tpu.memory_space<vmem>>, vector<1x2x128xf32>
      tpu.vector_store %arg5[%c0_140, %c0_141, %c0_142], %164 {strides = array<i32>} : memref<1x2x128xf32, #tpu.memory_space<vmem>>, vector<1x2x128xf32>,
    } else {
    }
    %c0_133 = arith.constant 0 : index
    %c0_134 = arith.constant 0 : index
    %c0_135 = arith.constant 0 : index
    %158 = vector.load %arg5[%c0_133, %c0_134, %c0_135] : memref<1x2x128xf32, #tpu.memory_space<vmem>>, vector<1x2x128xf32>
    %159 = vector.shape_cast %158 : vector<1x2x128xf32> to vector<2x128xf32>
    %160 = arith.addf %159, %154 : vector<2x128xf32>
    %c0_136 = arith.constant 0 : index
    %c0_137 = arith.constant 0 : index
    %c0_138 = arith.constant 0 : index
    %161 = vector.load %arg5[%c0_136, %c0_137, %c0_138] : memref<1x2x128xf32, #tpu.memory_space<vmem>>, vector<1x2x128xf32>
    %162 = vector.shape_cast %161 : vector<1x2x128xf32> to vector<2x128xf32>
    %163 = vector.shape_cast %160 : vector<2x128xf32> to vector<1x2x128xf32>
    tpu.vector_store %arg5[%c0_136, %c0_137, %c0_138], %163 {strides = array<i32>} : memref<1x2x128xf32, #tpu.memory_space<vmem>>, vector<1x2x128xf32>,
    return
  }
  func.func @transform_0(%arg0: i32, %arg1: i32) -> (i32, i32, i32, i32, i32) {
    %c0_i32 = arith.constant 0 : i32
    %c0_i32_0 = arith.constant 0 : i32
    %c0_i32_1 = arith.constant 0 : i32
    %c0_i32_2 = arith.constant 0 : i32
    %c0_i32_3 = arith.constant 0 : i32
    return %arg0, %c0_i32, %c0_i32_0, %c0_i32_1, %c0_i32_2 : i32, i32, i32, i32, i32
  }
  func.func @transform_1(%arg0: i32, %arg1: i32) -> (i32, i32, i32) {
    %c0_i32 = arith.constant 0 : i32
    %c0_i32_0 = arith.constant 0 : i32
    %c0_i32_1 = arith.constant 0 : i32
    %c0_i32_2 = arith.constant 0 : i32
    return %c0_i32, %c0_i32_0, %c0_i32_1 : i32, i32, i32
  }
  func.func @transform_2(%arg0: i32, %arg1: i32) -> (i32, i32, i32) {
    %c0_i32 = arith.constant 0 : i32
    %c0_i32_0 = arith.constant 0 : i32
    return %arg0, %arg1, %c0_i32 : i32, i32, i32
  }
  func.func @transform_3(%arg0: i32, %arg1: i32) -> (i32, i32, i32) {
    %c0_i32 = arith.constant 0 : i32
    %c0_i32_0 = arith.constant 0 : i32
    %c0_i32_1 = arith.constant 0 : i32
    return %arg0, %c0_i32, %c0_i32_0 : i32, i32, i32
  }
}

</mosaic_0001>

<llo_original>
// kernel: conv_block.3
$region0: #{conv_block.3}
  #allocation0 [shape = 'u32[]', space=smem, size = 0x4, offset = 0x4, fixed_abs, tag = 'smem constant byte address 0x4 - core index']
  #allocation1 [shape = 'u32[144,128]{1,0:T(1,128)}', space=vmem, size = 0x12000, scoped, tag = 'internal scratch']
  %s0 = inlined_call_operand.vmem [shape: f32[2,64,128], index: 0, kind: input, shape index: {}]
  %s1 = inlined_call_operand.vmem [shape: f32[2,2,128], index: 1, kind: input, shape index: {}]
  %s2 = inlined_call_operand.vmem [shape: f32[2,64,128], index: 2, kind: output, shape index: {}]
  %s3 = sld [smem:[#allocation0]]
  $region41: #{conv_block.3} parent=0
    _
  %s5 = ssub.s32 1, %s3
  %s6 = scalar_select 0, %s5, %s3
  loop: start=0, step=1, limit=6
  $region2: #{conv_block.3} parent=0 // loop_pre_header
    _
  $region3: #{conv_block.3} parent=0 // loop_header
    %s8 = sphi 0, %s12
    %p9 = scmp.ge.s32.totalorder %s8, 6
    %s15 = sphi 0, %s27
    %s16 = sphi 0, %s23
    %s17 = sphi 0, %s15
    %s18 = sphi 0, %s16
    %s19 = sphi 0, %s17
    %s20 = sphi 0, %s18
    %s32 = sphi 0, %s34
    %s35 = sphi 0, %s32
    %s36 = sphi 0, %s35
    %s52 = sphi 0, %s36
    %s58 = sphi 0, %s60
    %s61 = sphi 0, %s58
    %s62 = sphi 0, %s61
    %s78 = sphi 0, %s62
    %s86 = sphi 0, %s88
    %s89 = sphi 0, %s86
    %s90 = sphi 0, %s89
    %s106 = sphi 0, %s90
  $region4: #{conv_block.3} parent=0 // loop_header_branch
    %11 = sbr.rel (%p9) target = $region8
  $region5: #{conv_block.3} parent=0 // loop_body
    %s13 = ssub.s32 %s8, 1
    %s14 = ssub.s32 %s8, 2
    %s21 = sadd.s32 1, %s16
    %p22 = scmp.ge.s32.totalorder %s21, 2
    %s23 = scalar_select %p22, 0, %s21
    %s24 = sadd.s32 1, %s15
    %s25 = scalar_select %p22, %s24, %s15
    %p26 = scmp.ge.s32.totalorder %s25, 2
    %s27 = scalar_select %p26, 0, %s25
    %s28 = ssub.s32 %s15, %s27
    %s29 = ssub.s32 %s16, %s23
    %s30 = sor.u32 %s28, %s29
    %p31 = scmp.eq.s32.totalorder %s30, 0
    %s33 = sadd.s32 %s32, 1
    %s34 = scalar_select %p31, %s32, %s33
    %p37 = pneg %p31
    %p38 = scmp.eq.s32.totalorder %s8, 3
    %p39 = por %p37, %p38
    %p40 = scmp.ne.s32.totalorder %s32, %s35
    %p41 = scmp.eq.s32.totalorder %s8, 0
    %p42 = por %p40, %p41
    %p43 = scmp.ne.s32.totalorder %s32, %s35
    %p44 = scmp.eq.s32.totalorder %s13, 3
    %p45 = por %p43, %p44
    %p46 = scmp.ne.s32.totalorder %s35, %s36
    %p47 = scmp.eq.s32.totalorder %s13, 0
    %p48 = por %p46, %p47
    %p49 = scmp.ne.s32.totalorder %s35, %s36
    %p50 = scmp.eq.s32.totalorder %s14, 3
    %p51 = por %p49, %p50
    %p53 = scmp.ne.s32.totalorder %s36, %s52
    %p54 = scmp.eq.s32.totalorder %s14, 0
    %p55 = por %p53, %p54
    %s56 = ssub.s32 %s15, %s27
    %p57 = scmp.eq.s32.totalorder %s56, 0
    %s59 = sadd.s32 %s58, 1
    %s60 = scalar_select %p57, %s58, %s59
    %p63 = pneg %p57
    %p64 = scmp.eq.s32.totalorder %s8, 3
    %p65 = por %p63, %p64
    %p66 = scmp.ne.s32.totalorder %s58, %s61
    %p67 = scmp.eq.s32.totalorder %s8, 0
    %p68 = por %p66, %p67
    %p69 = scmp.ne.s32.totalorder %s58, %s61
    %p70 = scmp.eq.s32.totalorder %s13, 3
    %p71 = por %p69, %p70
    %p72 = scmp.ne.s32.totalorder %s61, %s62
    %p73 = scmp.eq.s32.totalorder %s13, 0
    %p74 = por %p72, %p73
    %p75 = scmp.ne.s32.totalorder %s61, %s62
    %p76 = scmp.eq.s32.totalorder %s14, 3
    %p77 = por %p75, %p76
    %p79 = scmp.ne.s32.totalorder %s62, %s78
    %p80 = scmp.eq.s32.totalorder %s14, 0
    %p81 = por %p79, %p80
    %s82 = ssub.s32 %s15, %s27
    %s83 = ssub.s32 %s16, %s23
    %s84 = sor.u32 %s82, %s83
    %p85 = scmp.eq.s32.totalorder %s84, 0
    %s87 = sadd.s32 %s86, 1
    %s88 = scalar_select %p85, %s86, %s87
    %p91 = pneg %p85
    %p92 = scmp.eq.s32.totalorder %s8, 3
    %p93 = por %p91, %p92
    %p94 = scmp.ne.s32.totalorder %s86, %s89
    %p95 = scmp.eq.s32.totalorder %s8, 0
    %p96 = por %p94, %p95
    %p97 = scmp.ne.s32.totalorder %s86, %s89
    %p98 = scmp.eq.s32.totalorder %s13, 3
    %p99 = por %p97, %p98
    %p100 = scmp.ne.s32.totalorder %s89, %s90
    %p101 = scmp.eq.s32.totalorder %s13, 0
    %p102 = por %p100, %p101
    %p103 = scmp.ne.s32.totalorder %s89, %s90
    %p104 = scmp.eq.s32.totalorder %s14, 3
    %p105 = por %p103, %p104
    %p107 = scmp.ne.s32.totalorder %s90, %s106
    %p108 = scmp.eq.s32.totalorder %s14, 0
    %p109 = por %p107, %p108
    %p110 = scmp.le.s32.totalorder 1, %s8
    %p111 = scmp.lt.s32.totalorder %s8, 5
    %p112 = pnand %p110, %p111
    %p113 = pneg %p112
    // Predicated region
    $region9: #{conv_block.3} parent=5 // pred_check
      _
    $region10: #{conv_block.3} parent=5 // pred_check_branch
      %115 = sbr.rel (%p112) target = $region12
    $region11: #{conv_block.3} parent=5 // pred_region
      %s116 = ssub.s32 %s8, 1
    $region12: #{conv_block.3} parent=5 // pred_fallthru
      _
    %p117 = scmp.lt.s32.totalorder %s8, 4
    // Predicated region
    $region13: #{conv_block.3} parent=5 // pred_check
      %p118 = pneg %p117
    $region14: #{conv_block.3} parent=5 // pred_check_branch
      %120 = sbr.rel (%p118) target = $region16
    $region15: #{conv_block.3} parent=5 // pred_region
      // Predicated region
      $region17: #{conv_block.3} parent=15 // pred_check
        %p121 = pneg %p42
      $region18: #{conv_block.3} parent=15 // pred_check_branch
        %123 = sbr.rel (%p121) target = $region20
      $region19: #{conv_block.3} parent=15 // pred_region
        %s124 = smul.u32 4, %s16
        %p125 = scmp.lt.s32.totalorder %s15, 1
        %s126 = scalar_select %p125, %s15, 1
        %p127 = scmp.lt.s32.totalorder %s124, 7
        %s128 = scalar_select %p127, %s124, 7
        %s129 = smul.addr %s126, 8
        %s130 = sadd.s32 %s128, %s129
        %s131 = smul.addr %s130, 8
        %s132 = scalar_lea.vmem %s0, %s131
        %s133 = smul.u32 4, %s16
      $region20: #{conv_block.3} parent=15 // pred_fallthru
        _
      // Predicated region
      $region21: #{conv_block.3} parent=15 // pred_check
        %p134 = pneg %p68
      $region22: #{conv_block.3} parent=15 // pred_check_branch
        %136 = sbr.rel (%p134) target = $region24
      $region23: #{conv_block.3} parent=15 // pred_region
        %p137 = scmp.lt.s32.totalorder %s15, 1
        %s138 = scalar_select %p137, %s15, 1
        %s139 = smul.addr %s138, 2
        %s140 = scalar_lea.vmem %s1, %s139
      $region24: #{conv_block.3} parent=15 // pred_fallthru
        _
    $region16: #{conv_block.3} parent=5 // pred_fallthru
      _
    %p141 = scmp.le.s32.totalorder 1, %s8
    %p142 = scmp.lt.s32.totalorder %s8, 5
    %p143 = pnand %p141, %p142
    %p144 = pneg %p143
    // Predicated region
    $region25: #{conv_block.3} parent=5 // pred_check
      _
    $region26: #{conv_block.3} parent=5 // pred_check_branch
      %146 = sbr.rel (%p143) target = $region28
    $region27: #{conv_block.3} parent=5 // pred_region
      %s147 = ssub.s32 %s8, 1
      %s148 = smul.u32 4, %s18
      %p149 = scmp.lt.s32.totalorder %s17, 1
      %s150 = scalar_select %p149, %s17, 1
      %p151 = scmp.lt.s32.totalorder %s148, 7
      %s152 = scalar_select %p151, %s148, 7
      %s153 = smul.addr %s150, 8
      %s154 = sadd.s32 %s152, %s153
      %s155 = smul.addr %s154, 8
      %s156 = scalar_lea.vmem %s0, %s155
      %p157 = pneg %p48
      %p158 = pneg %p45
      %p159 = scmp.lt.s32.totalorder %s17, 1
      %s160 = scalar_select %p159, %s17, 1
      %s161 = smul.addr %s160, 2
      %s162 = scalar_lea.vmem %s1, %s161
      %p163 = pneg %p74
      %p164 = pneg %p71
      %p165 = pneg %p102
      %p166 = pneg %p99
      %s167 = smul.u32 4, %s18
      %p168 = scmp.lt.s32.totalorder %s17, 1
      %s169 = scalar_select %p168, %s17, 1
      %p170 = scmp.lt.s32.totalorder %s167, 7
      %s171 = scalar_select %p170, %s167, 7
      %s172 = smul.addr %s169, 8
      %s173 = sadd.s32 %s171, %s172
      %s174 = smul.addr %s173, 8
      %s175 = scalar_lea.vmem %s2, %s174
      %s176 = smul.u32 4, %s18
      %p177 = scmp.lt.s32.totalorder %s17, 1
      %s178 = scalar_select %p177, %s17, 1
      %p179 = scmp.lt.s32.totalorder %s176, 7
      %s180 = scalar_select %p179, %s176, 7
      %s181 = smul.addr %s178, 8
      %s182 = sadd.s32 %s180, %s181
      %s183 = smul.addr %s182, 8
      %s184 = scalar_lea.vmem %s0, %s183
      %s185 = smul.u32 4, %s18
      %p186 = scmp.lt.s32.totalorder %s17, 1
      %s187 = scalar_select %p186, %s17, 1
      %s188 = smul.addr %s187, 2
      %s189 = scalar_lea.vmem %s1, %s188
      %s190 = smul.u32 4, %s18
      %p191 = scmp.lt.s32.totalorder %s17, 1
      %s192 = scalar_select %p191, %s17, 1
      %p193 = scmp.lt.s32.totalorder %s190, 7
      %s194 = scalar_select %p193, %s190, 7
      %s195 = smul.addr %s192, 8
      %s196 = sadd.s32 %s194, %s195
      %s197 = smul.addr %s196, 8
      %s198 = scalar_lea.vmem %s2, %s197
      %s199 = smul.u32 4, %s18
      %v200 = vld [vmem:[%s184] sm:$0xff]
      %v201 = vld [vmem:[%s184 + $0x8] sm:$0xff]
      %v202 = vld [vmem:[%s184 + $0x10] sm:$0xff]
      %v203 = vld [vmem:[%s184 + $0x18] sm:$0xff]
      %v204 = vld [vmem:[%s189] sm:$0x1]
      %v205 = vmul.f32 %v204, 0.015625
      %v206 = vld [vmem:[%s189 + $0x1] sm:$0x1]
      %v207 = vmul.f32 %v206, 0.015625
      %v208 = vmul.f32 %v205, %v205
      %v209 = vsub.f32 %v207, %v208
      %v210 = vmax.f32 %v209, 0.0
      %v211 = vadd.f32 %v210, 1e-05
      %v212 = vrsqrt.pop %v211
      %v213 = vlaneseq
      %v214 = vshrl.u32 %v213, 7
      %v215 = vsub.s32 0, %v214
      %v216 = vrot.slane %v205, %v215
      %v217 = vsub.f32 %v200, %v216
      %v218 = vsub.f32 %v201, %v216
      %v219 = vsub.f32 %v202, %v216
      %v220 = vsub.f32 %v203, %v216
      %v221 = vlaneseq
      %v222 = vshrl.u32 %v221, 7
      %v223 = vsub.s32 0, %v222
      %v224 = vrot.slane %v212, %v223
      %v225 = vmul.f32 %v217, %v224
      %v226 = vmul.f32 %v218, %v224
      %v227 = vmul.f32 %v219, %v224
      %v228 = vmul.f32 %v220, %v224
      %vm229 = vcmp.ge.f32.partialorder %v225, 0.0
      %vm230 = vcmp.ge.f32.partialorder %v226, 0.0
      %vm231 = vcmp.ge.f32.partialorder %v227, 0.0
      %vm232 = vcmp.ge.f32.partialorder %v228, 0.0
      %v233 = vmul.f32 %v225, 0.2
      %v234 = vmul.f32 %v226, 0.2
      %v235 = vmul.f32 %v227, 0.2
      %v236 = vmul.f32 %v228, 0.2
      %v237 = vsel %vm229, %v225, %v233
      %v238 = vsel %vm230, %v226, %v234
      %v239 = vsel %vm231, %v227, %v235
      %v240 = vsel %vm232, %v228, %v236
      %241 = vst [vmem:[%s198] sm:$0xff] %v237
      %242 = vst [vmem:[%s198 + $0x8] sm:$0xff] %v238
      %243 = vst [vmem:[%s198 + $0x10] sm:$0xff] %v239
      %244 = vst [vmem:[%s198 + $0x18] sm:$0xff] %v240
      %s245 = smul.u32 4, %s18
      %p246 = scmp.lt.s32.totalorder %s17, 1
      %s247 = scalar_select %p246, %s17, 1
      %p248 = scmp.lt.s32.totalorder %s245, 7
      %s249 = scalar_select %p248, %s245, 7
      %s250 = smul.addr %s247, 8
      %s251 = sadd.s32 %s249, %s250
      %s252 = smul.addr %s251, 8
      %s253 = scalar_lea.vmem %s2, %s252
      // Predicated region
      $region29: #{conv_block.3} parent=27 // pred_check
        %p254 = pneg %p99
      $region30: #{conv_block.3} parent=27 // pred_check_branch
        %256 = sbr.rel (%p254) target = $region32
      $region31: #{conv_block.3} parent=27 // pred_region
        %s257 = smul.u32 4, %s18
      $region32: #{conv_block.3} parent=27 // pred_fallthru
        _
    $region28: #{conv_block.3} parent=5 // pred_fallthru
      _
    %p258 = scmp.le.s32.totalorder 2, %s8
    // Predicated region
    $region33: #{conv_block.3} parent=5 // pred_check
      %p259 = pneg %p258
    $region34: #{conv_block.3} parent=5 // pred_check_branch
      %261 = sbr.rel (%p259) target = $region36
    $region35: #{conv_block.3} parent=5 // pred_region
      %s262 = ssub.s32 %s8, 2
      // Predicated region
      $region37: #{conv_block.3} parent=35 // pred_check
        %p263 = pneg %p105
      $region38: #{conv_block.3} parent=35 // pred_check_branch
        %265 = sbr.rel (%p263) target = $region40
      $region39: #{conv_block.3} parent=35 // pred_region
        %s266 = smul.u32 4, %s20
        %p267 = scmp.lt.s32.totalorder %s19, 1
        %s268 = scalar_select %p267, %s19, 1
        %p269 = scmp.lt.s32.totalorder %s266, 7
        %s270 = scalar_select %p269, %s266, 7
        %s271 = smul.addr %s268, 8
        %s272 = sadd.s32 %s270, %s271
        %s273 = smul.addr %s272, 8
        %s274 = scalar_lea.vmem %s2, %s273
      $region40: #{conv_block.3} parent=35 // pred_fallthru
        _
    $region36: #{conv_block.3} parent=5 // pred_fallthru
      _
  $region6: #{conv_block.3} parent=0 // loop_footer
    %s12 = sadd.s32 1, %s8
  $region7: #{conv_block.3} parent=0 // loop_footer_branch
    %7 = sbr.rel target = $region3
  $region8: #{conv_block.3} parent=0 // loop_exit
    _

// kernel: conv_block.2
$region0: #{conv_block.2}
  #allocation0 [shape = 'u32[]', space=smem, size = 0x4, offset = 0x4, fixed_abs, tag = 'smem constant byte address 0x4 - core index']
  #allocation1 [shape = 'u32[144,128]{1,0:T(1,128)}', space=vmem, size = 0x12000, scoped, tag = 'internal scratch']
  %s0 = inlined_call_operand.vmem [shape: bf16[2,4,9,9,4], index: 0, kind: input, shape index: {}]
  %s1 = inlined_call_operand.vmem [shape: bf16[16,4,128], index: 1, kind: input, shape index: {}]
  %s2 = inlined_call_operand.vmem [shape: f32[2,64,128], index: 2, kind: output, shape index: {0}]
  %s3 = inlined_call_operand.vmem [shape: f32[2,2,128], index: 3, kind: output, shape index: {1}]
  %4 = xla_tuple %s2, %s3
  %s5 = sld [smem:[#allocation0]]
  $region53: #{conv_block.2} parent=0
    _
  %s7 = ssub.s32 1, %s5
  %s8 = scalar_select 0, %s7, %s5
  loop: start=0, step=1, limit=6
  $region2: #{conv_block.2} parent=0 // loop_pre_header
    _
  $region3: #{conv_block.2} parent=0 // loop_header
    %s10 = sphi 0, %s14
    %p11 = scmp.ge.s32.totalorder %s10, 6
    %s17 = sphi 0, %s29
    %s18 = sphi 0, %s25
    %s19 = sphi 0, %s17
    %s20 = sphi 0, %s18
    %s21 = sphi 0, %s19
    %s22 = sphi 0, %s20
    %s32 = sphi 0, %s34
    %s35 = sphi 0, %s32
    %s36 = sphi 0, %s35
    %s52 = sphi 0, %s36
    %s56 = sphi 0, %s56
    %s58 = sphi 0, %s56
    %s59 = sphi 0, %s58
    %s73 = sphi 0, %s59
    %s81 = sphi 0, %s83
    %s84 = sphi 0, %s81
    %s85 = sphi 0, %s84
    %s101 = sphi 0, %s85
    %s107 = sphi 0, %s109
    %s110 = sphi 0, %s107
    %s111 = sphi 0, %s110
    %s127 = sphi 0, %s111
  $region4: #{conv_block.2} parent=0 // loop_header_branch
    %13 = sbr.rel (%p11) target = $region8
  $region5: #{conv_block.2} parent=0 // loop_body
    %s15 = ssub.s32 %s10, 1
    %s16 = ssub.s32 %s10, 2
    %s23 = sadd.s32 1, %s18
    %p24 = scmp.ge.s32.totalorder %s23, 2
    %s25 = scalar_select %p24, 0, %s23
    %s26 = sadd.s32 1, %s17
    %s27 = scalar_select %p24, %s26, %s17
    %p28 = scmp.ge.s32.totalorder %s27, 2
    %s29 = scalar_select %p28, 0, %s27
    %s30 = ssub.s32 %s17, %s29
    %p31 = scmp.eq.s32.totalorder %s30, 0
    %s33 = sadd.s32 %s32, 1
    %s34 = scalar_select %p31, %s32, %s33
    %p37 = pneg %p31
    %p38 = scmp.eq.s32.totalorder %s10, 3
    %p39 = por %p37, %p38
    %p40 = scmp.ne.s32.totalorder %s32, %s35
    %p41 = scmp.eq.s32.totalorder %s10, 0
    %p42 = por %p40, %p41
    %p43 = scmp.ne.s32.totalorder %s32, %s35
    %p44 = scmp.eq.s32.totalorder %s15, 3
    %p45 = por %p43, %p44
    %p46 = scmp.ne.s32.totalorder %s35, %s36
    %p47 = scmp.eq.s32.totalorder %s15, 0
    %p48 = por %p46, %p47
    %p49 = scmp.ne.s32.totalorder %s35, %s36
    %p50 = scmp.eq.s32.totalorder %s16, 3
    %p51 = por %p49, %p50
    %p53 = scmp.ne.s32.totalorder %s36, %s52
    %p54 = scmp.eq.s32.totalorder %s16, 0
    %p55 = por %p53, %p54
    %s57 = sadd.s32 %s56, 1
    %p60 = scmp.eq.s32.totalorder %s10, 3
    %p61 = scmp.ne.s32.totalorder %s56, %s58
    %p62 = scmp.eq.s32.totalorder %s10, 0
    %p63 = por %p61, %p62
    %p64 = scmp.ne.s32.totalorder %s56, %s58
    %p65 = scmp.eq.s32.totalorder %s15, 3
    %p66 = por %p64, %p65
    %p67 = scmp.ne.s32.totalorder %s58, %s59
    %p68 = scmp.eq.s32.totalorder %s15, 0
    %p69 = por %p67, %p68
    %p70 = scmp.ne.s32.totalorder %s58, %s59
    %p71 = scmp.eq.s32.totalorder %s16, 3
    %p72 = por %p70, %p71
    %p74 = scmp.ne.s32.totalorder %s59, %s73
    %p75 = scmp.eq.s32.totalorder %s16, 0
    %p76 = por %p74, %p75
    %s77 = ssub.s32 %s17, %s29
    %s78 = ssub.s32 %s18, %s25
    %s79 = sor.u32 %s77, %s78
    %p80 = scmp.eq.s32.totalorder %s79, 0
    %s82 = sadd.s32 %s81, 1
    %s83 = scalar_select %p80, %s81, %s82
    %p86 = pneg %p80
    %p87 = scmp.eq.s32.totalorder %s10, 3
    %p88 = por %p86, %p87
    %p89 = scmp.ne.s32.totalorder %s81, %s84
    %p90 = scmp.eq.s32.totalorder %s10, 0
    %p91 = por %p89, %p90
    %p92 = scmp.ne.s32.totalorder %s81, %s84
    %p93 = scmp.eq.s32.totalorder %s15, 3
    %p94 = por %p92, %p93
    %p95 = scmp.ne.s32.totalorder %s84, %s85
    %p96 = scmp.eq.s32.totalorder %s15, 0
    %p97 = por %p95, %p96
    %p98 = scmp.ne.s32.totalorder %s84, %s85
    %p99 = scmp.eq.s32.totalorder %s16, 3
    %p100 = por %p98, %p99
    %p102 = scmp.ne.s32.totalorder %s85, %s101
    %p103 = scmp.eq.s32.totalorder %s16, 0
    %p104 = por %p102, %p103
    %s105 = ssub.s32 %s17, %s29
    %p106 = scmp.eq.s32.totalorder %s105, 0
    %s108 = sadd.s32 %s107, 1
    %s109 = scalar_select %p106, %s107, %s108
    %p112 = pneg %p106
    %p113 = scmp.eq.s32.totalorder %s10, 3
    %p114 = por %p112, %p113
    %p115 = scmp.ne.s32.totalorder %s107, %s110
    %p116 = scmp.eq.s32.totalorder %s10, 0
    %p117 = por %p115, %p116
    %p118 = scmp.ne.s32.totalorder %s107, %s110
    %p119 = scmp.eq.s32.totalorder %s15, 3
    %p120 = por %p118, %p119
    %p121 = scmp.ne.s32.totalorder %s110, %s111
    %p122 = scmp.eq.s32.totalorder %s15, 0
    %p123 = por %p121, %p122
    %p124 = scmp.ne.s32.totalorder %s110, %s111
    %p125 = scmp.eq.s32.totalorder %s16, 3
    %p126 = por %p124, %p125
    %p128 = scmp.ne.s32.totalorder %s111, %s127
    %p129 = scmp.eq.s32.totalorder %s16, 0
    %p130 = por %p128, %p129
    %p131 = scmp.le.s32.totalorder 1, %s10
    %p132 = scmp.lt.s32.totalorder %s10, 5
    %p133 = pnand %p131, %p132
    %p134 = pneg %p133
    // Predicated region
    $region9: #{conv_block.2} parent=5 // pred_check
      _
    $region10: #{conv_block.2} parent=5 // pred_check_branch
      %136 = sbr.rel (%p133) target = $region12
    $region11: #{conv_block.2} parent=5 // pred_region
      %s137 = ssub.s32 %s10, 1
      // Predicated region
      $region13: #{conv_block.2} parent=11 // pred_check
        %p138 = pneg %p69
      $region14: #{conv_block.2} parent=11 // pred_check_branch
        %140 = sbr.rel (%p138) target = $region16
      $region15: #{conv_block.2} parent=11 // pred_region
        _
      $region16: #{conv_block.2} parent=11 // pred_fallthru
        _
    $region12: #{conv_block.2} parent=5 // pred_fallthru
      _
    %p141 = scmp.lt.s32.totalorder %s10, 4
    // Predicated region
    $region17: #{conv_block.2} parent=5 // pred_check
      %p142 = pneg %p141
    $region18: #{conv_block.2} parent=5 // pred_check_branch
      %144 = sbr.rel (%p142) target = $region20
    $region19: #{conv_block.2} parent=5 // pred_region
      // Predicated region
      $region21: #{conv_block.2} parent=19 // pred_check
        %p145 = pneg %p42
      $region22: #{conv_block.2} parent=19 // pred_check_branch
        %147 = sbr.rel (%p145) target = $region24
      $region23: #{conv_block.2} parent=19 // pred_region
        %p148 = scmp.lt.s32.totalorder %s17, 1
        %s149 = scalar_select %p148, %s17, 1
        %s150 = smul.addr %s149, 72
        %s151 = smul.addr %s150, 4
        %s152 = scalar_lea.vmem %s0, %s151
      $region24: #{conv_block.2} parent=19 // pred_fallthru
        _
    $region20: #{conv_block.2} parent=5 // pred_fallthru
      _
    %p153 = scmp.le.s32.totalorder 1, %s10
    %p154 = scmp.lt.s32.totalorder %s10, 5
    %p155 = pnand %p153, %p154
    %p156 = pneg %p155
    // Predicated region
    $region25: #{conv_block.2} parent=5 // pred_check
      _
    $region26: #{conv_block.2} parent=5 // pred_check_branch
      %158 = sbr.rel (%p155) target = $region28
    $region27: #{conv_block.2} parent=5 // pred_region
      %s159 = ssub.s32 %s10, 1
      %p160 = scmp.lt.s32.totalorder %s19, 1
      %s161 = scalar_select %p160, %s19, 1
      %s162 = smul.addr %s161, 72
      %s163 = smul.addr %s162, 4
      %s164 = scalar_lea.vmem %s0, %s163
      %p165 = pneg %p48
      %p166 = pneg %p45
      %p167 = pneg %p69
      %p168 = pneg %p66
      %p169 = pneg %p97
      %p170 = pneg %p94
      %s171 = smul.u32 4, %s20
      %p172 = scmp.lt.s32.totalorder %s19, 1
      %s173 = scalar_select %p172, %s19, 1
      %p174 = scmp.lt.s32.totalorder %s171, 7
      %s175 = scalar_select %p174, %s171, 7
      %s176 = smul.addr %s173, 8
      %s177 = sadd.s32 %s175, %s176
      %s178 = smul.addr %s177, 8
      %s179 = scalar_lea.vmem %s2, %s178
      %p180 = pneg %p123
      %p181 = pneg %p120
      %p182 = scmp.lt.s32.totalorder %s19, 1
      %s183 = scalar_select %p182, %s19, 1
      %s184 = smul.addr %s183, 2
      %s185 = scalar_lea.vmem %s3, %s184
      %p186 = scmp.lt.s32.totalorder %s19, 1
      %s187 = scalar_select %p186, %s19, 1
      %s188 = smul.addr %s187, 72
      %s189 = smul.addr %s188, 4
      %s190 = scalar_lea.vmem %s0, %s189
      %s191 = smul.u32 4, %s20
      %p192 = scmp.lt.s32.totalorder %s19, 1
      %s193 = scalar_select %p192, %s19, 1
      %p194 = scmp.lt.s32.totalorder %s191, 7
      %s195 = scalar_select %p194, %s191, 7
      %s196 = smul.addr %s193, 8
      %s197 = sadd.s32 %s195, %s196
      %s198 = smul.addr %s197, 8
      %s199 = scalar_lea.vmem %s2, %s198
      %s200 = smul.u32 4, %s20
      %p201 = scmp.lt.s32.totalorder %s19, 1
      %s202 = scalar_select %p201, %s19, 1
      %s203 = smul.addr %s202, 2
      %s204 = scalar_lea.vmem %s3, %s203
      %s206 = smul.u32 %s20, 4
      %s207 = smul.u32 %s206, 2
      %s208 = smul.addr %s207, 4
      %s209 = scalar_lea.vmem %s190, %s208
      %v210 = vld [vmem:[%s209] sm:$0xf]
      %v211 = vld [vmem:[%s209 + $0x8] sm:$0xf]
      %v212 = vld [vmem:[%s209 + $0x10] sm:$0xf]
      %v213 = vld [vmem:[%s209 + $0x18] sm:$0xf]
      %v214 = vld [vmem:[%s1] sm:$0x3]
      %s215 = sadd.s32 %s207, 18
      %s216 = smul.addr %s215, 4
      %s217 = scalar_lea.vmem %s190, %s216
      %v218 = vld [vmem:[%s217] sm:$0xf]
      %v219 = vld [vmem:[%s217 + $0x8] sm:$0xf]
      %v220 = vld [vmem:[%s217 + $0x10] sm:$0xf]
      %v221 = vld [vmem:[%s217 + $0x18] sm:$0xf]
      %s222 = scalar_lea.vmem %s1, 2
      %v223 = vld [vmem:[%s222] sm:$0x3]
      %v228 = vunpack.c.l.b16 %v218
      %v229 = vunpack.c.l.b16 %v219
      %v230 = vunpack.c.l.b16 %v220
      %v231 = vunpack.c.l.b16 %v221
      %v232 = vpack.c.b16 %v229, %v228
      %v233 = vpack.c.b16 %v231, %v230
      %vm234 = vcmask 31744
      %v236 = vsel %vm234, %v232, 0
      %v239 = vsel %vm234, %v233, 0
      %vm241 = vcmask 1041408
      %v243 = vsel %vm241, %v223, 0
      %245 = vmatprep.subr.bf16.mxu0 0
      %246 = vmatpush1.bf16.msra.mxu0 %v243
      %247 = vmatprep.subr.bf16.mxu0 0
      %248 = vmatpush1.bf16.msra.mxu0 0
      %249 = vmatprep.subr.bf16.mxu0 0
      %250 = vmatpush1.bf16.msra.mxu0 0
      %251 = vmatprep.subr.bf16.mxu0 0
      %252 = vmatpush1.bf16.msra.mxu0 0
      %253 = vmatprep.subr.bf16.mxu0 0
      %254 = vmatpush1.bf16.msra.mxu0 0
      %255 = vmatprep.subr.bf16.mxu0 0
      %256 = vmatpush1.bf16.msra.mxu0 0
      %257 = vmatprep.subr.bf16.mxu0 0
      %258 = vmatpush1.bf16.msra.mxu0 0
      %259 = vmatprep.subr.bf16.mxu0 0
      %260 = vmatpush1.bf16.msra.mxu0 0
      %261 = vmatprep.subr.bf16.mxu0 0
      %262 = vmatpush1.bf16.msra.mxu0 0
      %263 = vmatprep.subr.bf16.mxu0 0
      %264 = vmatpush1.bf16.msra.mxu0 0
      %265 = vmatprep.subr.bf16.mxu0 0
      %266 = vmatpush1.bf16.msra.mxu0 0
      %267 = vmatprep.subr.bf16.mxu0 0
      %268 = vmatpush1.bf16.msra.mxu0 0
      %269 = vmatprep.subr.bf16.mxu0 0
      %270 = vmatpush1.bf16.msra.mxu0 0
      %271 = vmatprep.subr.bf16.mxu0 0
      %272 = vmatpush1.bf16.msra.mxu0 0
      %273 = vmatprep.subr.bf16.mxu0 0
      %274 = vmatpush1.bf16.msra.mxu0 0
      %275 = vmatprep.subr.bf16.mxu0 0
      %276 = vmatpush1.bf16.msra.mxu0 0
      %277 = vmatprep.mubr.bf16.mxu0 0
      %278 = vmatmul.mubr.bf16.gmra.mrb[0].mxu0 %v236
      %v279 = vpop.f32.mrb[0].mxu0
      %v280 = vadd.f32 0.0, %v279
      %v281 = vpop.f32.mrb[0].mxu0
      %v282 = vpop.f32.mrb[0].mxu0
      %v283 = vadd.f32 0.0, %v282
      %v284 = vpop.f32.mrb[0].mxu0
      %285 = vmatprep.mubr.bf16.mxu0 0
      %286 = vmatmul.mubr.bf16.gmra.mrb[0].mxu0 %v239
      %v287 = vpop.f32.mrb[0].mxu0
      %v288 = vadd.f32 0.0, %v287
      %v289 = vpop.f32.mrb[0].mxu0
      %v290 = vpop.f32.mrb[0].mxu0
      %v291 = vadd.f32 0.0, %v290
      %v292 = vpop.f32.mrb[0].mxu0
      %293 = vdwg.mxu0
      %v298 = vunpack.c.l.b16 %v210
      %v299 = vunpack.c.l.b16 %v211
      %v300 = vunpack.c.l.b16 %v212
      %v301 = vunpack.c.l.b16 %v213
      %v302 = vpack.c.b16 %v299, %v298
      %v303 = vpack.c.b16 %v301, %v300
      %v305 = vsel %vm234, %v302, 0
      %v308 = vsel %vm234, %v303, 0
      %v311 = vsel %vm241, %v214, 0
      %313 = vmatprep.subr.bf16.mxu0 0
      %314 = vmatpush1.bf16.msra.mxu0 %v311
      %315 = vmatprep.subr.bf16.mxu0 0
      %316 = vmatpush1.bf16.msra.mxu0 0
      %317 = vmatprep.subr.bf16.mxu0 0
      %318 = vmatpush1.bf16.msra.mxu0 0
      %319 = vmatprep.subr.bf16.mxu0 0
      %320 = vmatpush1.bf16.msra.mxu0 0
      %321 = vmatprep.subr.bf16.mxu0 0
      %322 = vmatpush1.bf16.msra.mxu0 0
      %323 = vmatprep.subr.bf16.mxu0 0
      %324 = vmatpush1.bf16.msra.mxu0 0
      %325 = vmatprep.subr.bf16.mxu0 0
      %326 = vmatpush1.bf16.msra.mxu0 0
      %327 = vmatprep.subr.bf16.mxu0 0
      %328 = vmatpush1.bf16.msra.mxu0 0
      %329 = vmatprep.subr.bf16.mxu0 0
      %330 = vmatpush1.bf16.msra.mxu0 0
      %331 = vmatprep.subr.bf16.mxu0 0
      %332 = vmatpush1.bf16.msra.mxu0 0
      %333 = vmatprep.subr.bf16.mxu0 0
      %334 = vmatpush1.bf16.msra.mxu0 0
      %335 = vmatprep.subr.bf16.mxu0 0
      %336 = vmatpush1.bf16.msra.mxu0 0
      %337 = vmatprep.subr.bf16.mxu0 0
      %338 = vmatpush1.bf16.msra.mxu0 0
      %339 = vmatprep.subr.bf16.mxu0 0
      %340 = vmatpush1.bf16.msra.mxu0 0
      %341 = vmatprep.subr.bf16.mxu0 0
      %342 = vmatpush1.bf16.msra.mxu0 0
      %343 = vmatprep.subr.bf16.mxu0 0
      %344 = vmatpush1.bf16.msra.mxu0 0
      %345 = vmatprep.mubr.bf16.mxu0 0
      %346 = vmatmul.mubr.bf16.gmra.mrb[0].mxu0 %v305
      %v347 = vpop.f32.mrb[0].mxu0
      %v348 = vadd.f32 %v280, %v347
      %v349 = vpop.f32.mrb[0].mxu0
      %v350 = vpop.f32.mrb[0].mxu0
      %v351 = vadd.f32 %v283, %v350
      %v352 = vpop.f32.mrb[0].mxu0
      %353 = vmatprep.mubr.bf16.mxu0 0
      %354 = vmatmul.mubr.bf16.gmra.mrb[0].mxu0 %v308
      %v355 = vpop.f32.mrb[0].mxu0
      %v356 = vadd.f32 %v288, %v355
      %v357 = vpop.f32.mrb[0].mxu0
      %v358 = vpop.f32.mrb[0].mxu0
      %v359 = vadd.f32 %v291, %v358
      %v360 = vpop.f32.mrb[0].mxu0
      %361 = vdwg.mxu0
      %v362 = vld [vmem:[%s209] sm:$0xf]
      %v363 = vld [vmem:[%s209 + $0x4] sm:$0x1]
      %v364 = vld [vmem:[%s209 + $0x8] sm:$0xf]
      %v365 = vld [vmem:[%s209 + $0xc] sm:$0x1]
      %v366 = vld [vmem:[%s209 + $0x10] sm:$0xf]
      %v367 = vld [vmem:[%s209 + $0x14] sm:$0x1]
      %v368 = vld [vmem:[%s209 + $0x18] sm:$0xf]
      %v369 = vld [vmem:[%s209 + $0x1c] sm:$0x1]
      %vm370 = vsmask.f32 3328
      %vm371 = vsmask.f32 7440
      %vm372 = vmor %vm370, %vm371
      %v374 = vshrl.u32 %v362, 16
      %v376 = vrot.slane %v374, 4
      %v377 = vshll.u32 %v362, 16
      %v379 = vrot.slane %v377, 5
      %v380 = vor.u32 %v376, %v379
      %v381 = vrot.slane %v380, 4
      %v383 = vshll.u32 %v363, 16
      %v385 = vrot.slane %v383, 5
      %v386 = vsel %vm372, %v381, %v385
      %v388 = vshrl.u32 %v364, 16
      %v390 = vrot.slane %v388, 4
      %v391 = vshll.u32 %v364, 16
      %v393 = vrot.slane %v391, 5
      %v394 = vor.u32 %v390, %v393
      %v395 = vrot.slane %v394, 4
      %v397 = vshll.u32 %v365, 16
      %v399 = vrot.slane %v397, 5
      %v400 = vsel %vm372, %v395, %v399
      %v402 = vshrl.u32 %v366, 16
      %v404 = vrot.slane %v402, 4
      %v405 = vshll.u32 %v366, 16
      %v407 = vrot.slane %v405, 5
      %v408 = vor.u32 %v404, %v407
      %v409 = vrot.slane %v408, 4
      %v411 = vshll.u32 %v367, 16
      %v413 = vrot.slane %v411, 5
      %v414 = vsel %vm372, %v409, %v413
      %v416 = vshrl.u32 %v368, 16
      %v418 = vrot.slane %v416, 4
      %v419 = vshll.u32 %v368, 16
      %v421 = vrot.slane %v419, 5
      %v422 = vor.u32 %v418, %v421
      %v423 = vrot.slane %v422, 4
      %v425 = vshll.u32 %v369, 16
      %v427 = vrot.slane %v425, 5
      %v428 = vsel %vm372, %v423, %v427
      %s429 = scalar_lea.vmem %s1, 4
      %v430 = vld [vmem:[%s429] sm:$0x3]
      %v431 = vunpack.c.l.b16 %v386
      %v432 = vunpack.c.l.b16 %v400
      %v433 = vunpack.c.l.b16 %v414
      %v434 = vunpack.c.l.b16 %v428
      %v435 = vpack.c.b16 %v432, %v431
      %v436 = vpack.c.b16 %v434, %v433
      %v438 = vsel %vm234, %v435, 0
      %v441 = vsel %vm234, %v436, 0
      %v444 = vsel %vm241, %v430, 0
      %446 = vmatprep.subr.bf16.mxu0 0
      %447 = vmatpush1.bf16.msra.mxu0 %v444
      %448 = vmatprep.subr.bf16.mxu0 0
      %449 = vmatpush1.bf16.msra.mxu0 0
      %450 = vmatprep.subr.bf16.mxu0 0
      %451 = vmatpush1.bf16.msra.mxu0 0
      %452 = vmatprep.subr.bf16.mxu0 0
      %453 = vmatpush1.bf16.msra.mxu0 0
      %454 = vmatprep.subr.bf16.mxu0 0
      %455 = vmatpush1.bf16.msra.mxu0 0
      %456 = vmatprep.subr.bf16.mxu0 0
      %457 = vmatpush1.bf16.msra.mxu0 0
      %458 = vmatprep.subr.bf16.mxu0 0
      %459 = vmatpush1.bf16.msra.mxu0 0
      %460 = vmatprep.subr.bf16.mxu0 0
      %461 = vmatpush1.bf16.msra.mxu0 0
      %462 = vmatprep.subr.bf16.mxu0 0
      %463 = vmatpush1.bf16.msra.mxu0 0
      %464 = vmatprep.subr.bf16.mxu0 0
      %465 = vmatpush1.bf16.msra.mxu0 0
      %466 = vmatprep.subr.bf16.mxu0 0
      %467 = vmatpush1.bf16.msra.mxu0 0
      %468 = vmatprep.subr.bf16.mxu0 0
      %469 = vmatpush1.bf16.msra.mxu0 0
      %470 = vmatprep.subr.bf16.mxu0 0
      %471 = vmatpush1.bf16.msra.mxu0 0
      %472 = vmatprep.subr.bf16.mxu0 0
      %473 = vmatpush1.bf16.msra.mxu0 0
      %474 = vmatprep.subr.bf16.mxu0 0
      %475 = vmatpush1.bf16.msra.mxu0 0
      %476 = vmatprep.subr.bf16.mxu0 0
      %477 = vmatpush1.bf16.msra.mxu0 0
      %478 = vmatprep.mubr.bf16.mxu0 0
      %479 = vmatmul.mubr.bf16.gmra.mrb[0].mxu0 %v438
      %v480 = vpop.f32.mrb[0].mxu0
      %v481 = vadd.f32 0.0, %v480
      %v482 = vpop.f32.mrb[0].mxu0
      %v483 = vpop.f32.mrb[0].mxu0
      %v484 = vadd.f32 0.0, %v483
      %v485 = vpop.f32.mrb[0].mxu0
      %486 = vmatprep.mubr.bf16.mxu0 0
      %487 = vmatmul.mubr.bf16.gmra.mrb[0].mxu0 %v441
      %v488 = vpop.f32.mrb[0].mxu0
      %v489 = vadd.f32 0.0, %v488
      %v490 = vpop.f32.mrb[0].mxu0
      %v491 = vpop.f32.mrb[0].mxu0
      %v492 = vadd.f32 0.0, %v491
      %v493 = vpop.f32.mrb[0].mxu0
      %494 = vdwg.mxu0
      %v495 = vadd.f32 %v348, %v481
      %v496 = vadd.f32 %v351, %v484
      %v497 = vadd.f32 %v356, %v489
      %v498 = vadd.f32 %v359, %v492
      %v499 = vld [vmem:[%s217] sm:$0xf]
      %v500 = vld [vmem:[%s217 + $0x4] sm:$0x1]
      %v501 = vld [vmem:[%s217 + $0x8] sm:$0xf]
      %v502 = vld [vmem:[%s217 + $0xc] sm:$0x1]
      %v503 = vld [vmem:[%s217 + $0x10] sm:$0xf]
      %v504 = vld [vmem:[%s217 + $0x14] sm:$0x1]
      %v505 = vld [vmem:[%s217 + $0x18] sm:$0xf]
      %v506 = vld [vmem:[%s217 + $0x1c] sm:$0x1]
      %v508 = vshrl.u32 %v499, 16
      %v510 = vrot.slane %v508, 4
      %v511 = vshll.u32 %v499, 16
      %v513 = vrot.slane %v511, 5
      %v514 = vor.u32 %v510, %v513
      %v515 = vrot.slane %v514, 4
      %v517 = vshll.u32 %v500, 16
      %v519 = vrot.slane %v517, 5
      %v520 = vsel %vm372, %v515, %v519
      %v522 = vshrl.u32 %v501, 16
      %v524 = vrot.slane %v522, 4
      %v525 = vshll.u32 %v501, 16
      %v527 = vrot.slane %v525, 5
      %v528 = vor.u32 %v524, %v527
      %v529 = vrot.slane %v528, 4
      %v531 = vshll.u32 %v502, 16
      %v533 = vrot.slane %v531, 5
      %v534 = vsel %vm372, %v529, %v533
      %v536 = vshrl.u32 %v503, 16
      %v538 = vrot.slane %v536, 4
      %v539 = vshll.u32 %v503, 16
      %v541 = vrot.slane %v539, 5
      %v542 = vor.u32 %v538, %v541
      %v543 = vrot.slane %v542, 4
      %v545 = vshll.u32 %v504, 16
      %v547 = vrot.slane %v545, 5
      %v548 = vsel %vm372, %v543, %v547
      %v550 = vshrl.u32 %v505, 16
      %v552 = vrot.slane %v550, 4
      %v553 = vshll.u32 %v505, 16
      %v555 = vrot.slane %v553, 5
      %v556 = vor.u32 %v552, %v555
      %v557 = vrot.slane %v556, 4
      %v559 = vshll.u32 %v506, 16
      %v561 = vrot.slane %v559, 5
      %v562 = vsel %vm372, %v557, %v561
      %s563 = scalar_lea.vmem %s1, 6
      %v564 = vld [vmem:[%s563] sm:$0x3]
      %v565 = vunpack.c.l.b16 %v520
      %v566 = vunpack.c.l.b16 %v534
      %v567 = vunpack.c.l.b16 %v548
      %v568 = vunpack.c.l.b16 %v562
      %v569 = vpack.c.b16 %v566, %v565
      %v570 = vpack.c.b16 %v568, %v567
      %v572 = vsel %vm234, %v569, 0
      %v575 = vsel %vm234, %v570, 0
      %v578 = vsel %vm241, %v564, 0
      %580 = vmatprep.subr.bf16.mxu0 0
      %581 = vmatpush1.bf16.msra.mxu0 %v578
      %582 = vmatprep.subr.bf16.mxu0 0
      %583 = vmatpush1.bf16.msra.mxu0 0
      %584 = vmatprep.subr.bf16.mxu0 0
      %585 = vmatpush1.bf16.msra.mxu0 0
      %586 = vmatprep.subr.bf16.mxu0 0
      %587 = vmatpush1.bf16.msra.mxu0 0
      %588 = vmatprep.subr.bf16.mxu0 0
      %589 = vmatpush1.bf16.msra.mxu0 0
      %590 = vmatprep.subr.bf16.mxu0 0
      %591 = vmatpush1.bf16.msra.mxu0 0
      %592 = vmatprep.subr.bf16.mxu0 0
      %593 = vmatpush1.bf16.msra.mxu0 0
      %594 = vmatprep.subr.bf16.mxu0 0
      %595 = vmatpush1.bf16.msra.mxu0 0
      %596 = vmatprep.subr.bf16.mxu0 0
      %597 = vmatpush1.bf16.msra.mxu0 0
      %598 = vmatprep.subr.bf16.mxu0 0
      %599 = vmatpush1.bf16.msra.mxu0 0
      %600 = vmatprep.subr.bf16.mxu0 0
      %601 = vmatpush1.bf16.msra.mxu0 0
      %602 = vmatprep.subr.bf16.mxu0 0
      %603 = vmatpush1.bf16.msra.mxu0 0
      %604 = vmatprep.subr.bf16.mxu0 0
      %605 = vmatpush1.bf16.msra.mxu0 0
      %606 = vmatprep.subr.bf16.mxu0 0
      %607 = vmatpush1.bf16.msra.mxu0 0
      %608 = vmatprep.subr.bf16.mxu0 0
      %609 = vmatpush1.bf16.msra.mxu0 0
      %610 = vmatprep.subr.bf16.mxu0 0
      %611 = vmatpush1.bf16.msra.mxu0 0
      %612 = vmatprep.mubr.bf16.mxu0 0
      %613 = vmatmul.mubr.bf16.gmra.mrb[0].mxu0 %v572
      %v614 = vpop.f32.mrb[0].mxu0
      %v615 = vadd.f32 0.0, %v614
      %v616 = vpop.f32.mrb[0].mxu0
      %v617 = vpop.f32.mrb[0].mxu0
      %v618 = vadd.f32 0.0, %v617
      %v619 = vpop.f32.mrb[0].mxu0
      %620 = vmatprep.mubr.bf16.mxu0 0
      %621 = vmatmul.mubr.bf16.gmra.mrb[0].mxu0 %v575
      %v622 = vpop.f32.mrb[0].mxu0
      %v623 = vadd.f32 0.0, %v622
      %v624 = vpop.f32.mrb[0].mxu0
      %v625 = vpop.f32.mrb[0].mxu0
      %v626 = vadd.f32 0.0, %v625
      %v627 = vpop.f32.mrb[0].mxu0
      %628 = vdwg.mxu0
      %v629 = vadd.f32 %v495, %v615
      %v630 = vadd.f32 %v496, %v618
      %v631 = vadd.f32 %v497, %v623
      %v632 = vadd.f32 %v498, %v626
      %s633 = sadd.s32 %s207, 36
      %s634 = smul.addr %s633, 4
      %s635 = scalar_lea.vmem %s190, %s634
      %v636 = vld [vmem:[%s635] sm:$0xf]
      %v637 = vld [vmem:[%s635 + $0x8] sm:$0xf]
      %v638 = vld [vmem:[%s635 + $0x10] sm:$0xf]
      %v639 = vld [vmem:[%s635 + $0x18] sm:$0xf]
      %s640 = scalar_lea.vmem %s1, 8
      %v641 = vld [vmem:[%s640] sm:$0x3]
      %v646 = vunpack.c.l.b16 %v636
      %v647 = vunpack.c.l.b16 %v637
      %v648 = vunpack.c.l.b16 %v638
      %v649 = vunpack.c.l.b16 %v639
      %v650 = vpack.c.b16 %v647, %v646
      %v651 = vpack.c.b16 %v649, %v648
      %v653 = vsel %vm234, %v650, 0
      %v656 = vsel %vm234, %v651, 0
      %v659 = vsel %vm241, %v641, 0
      %661 = vmatprep.subr.bf16.mxu0 0
      %662 = vmatpush1.bf16.msra.mxu0 %v659
      %663 = vmatprep.subr.bf16.mxu0 0
      %664 = vmatpush1.bf16.msra.mxu0 0
      %665 = vmatprep.subr.bf16.mxu0 0
      %666 = vmatpush1.bf16.msra.mxu0 0
      %667 = vmatprep.subr.bf16.mxu0 0
      %668 = vmatpush1.bf16.msra.mxu0 0
      %669 = vmatprep.subr.bf16.mxu0 0
      %670 = vmatpush1.bf16.msra.mxu0 0
      %671 = vmatprep.subr.bf16.mxu0 0
      %672 = vmatpush1.bf16.msra.mxu0 0
      %673 = vmatprep.subr.bf16.mxu0 0
      %674 = vmatpush1.bf16.msra.mxu0 0
      %675 = vmatprep.subr.bf16.mxu0 0
      %676 = vmatpush1.bf16.msra.mxu0 0
      %677 = vmatprep.subr.bf16.mxu0 0
      %678 = vmatpush1.bf16.msra.mxu0 0
      %679 = vmatprep.subr.bf16.mxu0 0
      %680 = vmatpush1.bf16.msra.mxu0 0
      %681 = vmatprep.subr.bf16.mxu0 0
      %682 = vmatpush1.bf16.msra.mxu0 0
      %683 = vmatprep.subr.bf16.mxu0 0
      %684 = vmatpush1.bf16.msra.mxu0 0
      %685 = vmatprep.subr.bf16.mxu0 0
      %686 = vmatpush1.bf16.msra.mxu0 0
      %687 = vmatprep.subr.bf16.mxu0 0
      %688 = vmatpush1.bf16.msra.mxu0 0
      %689 = vmatprep.subr.bf16.mxu0 0
      %690 = vmatpush1.bf16.msra.mxu0 0
      %691 = vmatprep.subr.bf16.mxu0 0
      %692 = vmatpush1.bf16.msra.mxu0 0
      %693 = vmatprep.mubr.bf16.mxu0 0
      %694 = vmatmul.mubr.bf16.gmra.mrb[0].mxu0 %v653
      %v695 = vpop.f32.mrb[0].mxu0
      %v696 = vadd.f32 0.0, %v695
      %v697 = vpop.f32.mrb[0].mxu0
      %v698 = vpop.f32.mrb[0].mxu0
      %v699 = vadd.f32 0.0, %v698
      %v700 = vpop.f32.mrb[0].mxu0
      %701 = vmatprep.mubr.bf16.mxu0 0
      %702 = vmatmul.mubr.bf16.gmra.mrb[0].mxu0 %v656
      %v703 = vpop.f32.mrb[0].mxu0
      %v704 = vadd.f32 0.0, %v703
      %v705 = vpop.f32.mrb[0].mxu0
      %v706 = vpop.f32.mrb[0].mxu0
      %v707 = vadd.f32 0.0, %v706
      %v708 = vpop.f32.mrb[0].mxu0
      %709 = vdwg.mxu0
      %v710 = vadd.f32 %v629, %v696
      %v711 = vadd.f32 %v630, %v699
      %v712 = vadd.f32 %v631, %v704
      %v713 = vadd.f32 %v632, %v707
      %s714 = sadd.s32 %s207, 54
      %s715 = smul.addr %s714, 4
      %s716 = scalar_lea.vmem %s190, %s715
      %v717 = vld [vmem:[%s716] sm:$0xf]
      %v718 = vld [vmem:[%s716 + $0x8] sm:$0xf]
      %v719 = vld [vmem:[%s716 + $0x10] sm:$0xf]
      %v720 = vld [vmem:[%s716 + $0x18] sm:$0xf]
      %s721 = scalar_lea.vmem %s1, 10
      %v722 = vld [vmem:[%s721] sm:$0x3]
      %v727 = vunpack.c.l.b16 %v717
      %v728 = vunpack.c.l.b16 %v718
      %v729 = vunpack.c.l.b16 %v719
      %v730 = vunpack.c.l.b16 %v720
      %v731 = vpack.c.b16 %v728, %v727
      %v732 = vpack.c.b16 %v730, %v729
      %v734 = vsel %vm234, %v731, 0
      %v737 = vsel %vm234, %v732, 0
      %v740 = vsel %vm241, %v722, 0
      %742 = vmatprep.subr.bf16.mxu0 0
      %743 = vmatpush1.bf16.msra.mxu0 %v740
      %744 = vmatprep.subr.bf16.mxu0 0
      %745 = vmatpush1.bf16.msra.mxu0 0
      %746 = vmatprep.subr.bf16.mxu0 0
      %747 = vmatpush1.bf16.msra.mxu0 0
      %748 = vmatprep.subr.bf16.mxu0 0
      %749 = vmatpush1.bf16.msra.mxu0 0
      %750 = vmatprep.subr.bf16.mxu0 0
      %751 = vmatpush1.bf16.msra.mxu0 0
      %752 = vmatprep.subr.bf16.mxu0 0
      %753 = vmatpush1.bf16.msra.mxu0 0
      %754 = vmatprep.subr.bf16.mxu0 0
      %755 = vmatpush1.bf16.msra.mxu0 0
      %756 = vmatprep.subr.bf16.mxu0 0
      %757 = vmatpush1.bf16.msra.mxu0 0
      %758 = vmatprep.subr.bf16.mxu0 0
      %759 = vmatpush1.bf16.msra.mxu0 0
      %760 = vmatprep.subr.bf16.mxu0 0
      %761 = vmatpush1.bf16.msra.mxu0 0
      %762 = vmatprep.subr.bf16.mxu0 0
      %763 = vmatpush1.bf16.msra.mxu0 0
      %764 = vmatprep.subr.bf16.mxu0 0
      %765 = vmatpush1.bf16.msra.mxu0 0
      %766 = vmatprep.subr.bf16.mxu0 0
      %767 = vmatpush1.bf16.msra.mxu0 0
      %768 = vmatprep.subr.bf16.mxu0 0
      %769 = vmatpush1.bf16.msra.mxu0 0
      %770 = vmatprep.subr.bf16.mxu0 0
      %771 = vmatpush1.bf16.msra.mxu0 0
      %772 = vmatprep.subr.bf16.mxu0 0
      %773 = vmatpush1.bf16.msra.mxu0 0
      %774 = vmatprep.mubr.bf16.mxu0 0
      %775 = vmatmul.mubr.bf16.gmra.mrb[0].mxu0 %v734
      %v776 = vpop.f32.mrb[0].mxu0
      %v777 = vadd.f32 0.0, %v776
      %v778 = vpop.f32.mrb[0].mxu0
      %v779 = vpop.f32.mrb[0].mxu0
      %v780 = vadd.f32 0.0, %v779
      %v781 = vpop.f32.mrb[0].mxu0
      %782 = vmatprep.mubr.bf16.mxu0 0
      %783 = vmatmul.mubr.bf16.gmra.mrb[0].mxu0 %v737
      %v784 = vpop.f32.mrb[0].mxu0
      %v785 = vadd.f32 0.0, %v784
      %v786 = vpop.f32.mrb[0].mxu0
      %v787 = vpop.f32.mrb[0].mxu0
      %v788 = vadd.f32 0.0, %v787
      %v789 = vpop.f32.mrb[0].mxu0
      %790 = vdwg.mxu0
      %v791 = vadd.f32 %v710, %v777
      %v792 = vadd.f32 %v711, %v780
      %v793 = vadd.f32 %v712, %v785
      %v794 = vadd.f32 %v713, %v788
      %v795 = vld [vmem:[%s635] sm:$0xf]
      %v796 = vld [vmem:[%s635 + $0x4] sm:$0x1]
      %v797 = vld [vmem:[%s635 + $0x8] sm:$0xf]
      %v798 = vld [vmem:[%s635 + $0xc] sm:$0x1]
      %v799 = vld [vmem:[%s635 + $0x10] sm:$0xf]
      %v800 = vld [vmem:[%s635 + $0x14] sm:$0x1]
      %v801 = vld [vmem:[%s635 + $0x18] sm:$0xf]
      %v802 = vld [vmem:[%s635 + $0x1c] sm:$0x1]
      %v804 = vshrl.u32 %v795, 16
      %v806 = vrot.slane %v804, 4
      %v807 = vshll.u32 %v795, 16
      %v809 = vrot.slane %v807, 5
      %v810 = vor.u32 %v806, %v809
      %v811 = vrot.slane %v810, 4
      %v813 = vshll.u32 %v796, 16
      %v815 = vrot.slane %v813, 5
      %v816 = vsel %vm372, %v811, %v815
      %v818 = vshrl.u32 %v797, 16
      %v820 = vrot.slane %v818, 4
      %v821 = vshll.u32 %v797, 16
      %v823 = vrot.slane %v821, 5
      %v824 = vor.u32 %v820, %v823
      %v825 = vrot.slane %v824, 4
      %v827 = vshll.u32 %v798, 16
      %v829 = vrot.slane %v827, 5
      %v830 = vsel %vm372, %v825, %v829
      %v832 = vshrl.u32 %v799, 16
      %v834 = vrot.slane %v832, 4
      %v835 = vshll.u32 %v799, 16
      %v837 = vrot.slane %v835, 5
      %v838 = vor.u32 %v834, %v837
      %v839 = vrot.slane %v838, 4
      %v841 = vshll.u32 %v800, 16
      %v843 = vrot.slane %v841, 5
      %v844 = vsel %vm372, %v839, %v843
      %v846 = vshrl.u32 %v801, 16
      %v848 = vrot.slane %v846, 4
      %v849 = vshll.u32 %v801, 16
      %v851 = vrot.slane %v849, 5
      %v852 = vor.u32 %v848, %v851
      %v853 = vrot.slane %v852, 4
      %v855 = vshll.u32 %v802, 16
      %v857 = vrot.slane %v855, 5
      %v858 = vsel %vm372, %v853, %v857
      %s859 = scalar_lea.vmem %s1, 12
      %v860 = vld [vmem:[%s859] sm:$0x3]
      %v861 = vunpack.c.l.b16 %v816
      %v862 = vunpack.c.l.b16 %v830
      %v863 = vunpack.c.l.b16 %v844
      %v864 = vunpack.c.l.b16 %v858
      %v865 = vpack.c.b16 %v862, %v861
      %v866 = vpack.c.b16 %v864, %v863
      %v868 = vsel %vm234, %v865, 0
      %v871 = vsel %vm234, %v866, 0
      %v874 = vsel %vm241, %v860, 0
      %876 = vmatprep.subr.bf16.mxu0 0
      %877 = vmatpush1.bf16.msra.mxu0 %v874
      %878 = vmatprep.subr.bf16.mxu0 0
      %879 = vmatpush1.bf16.msra.mxu0 0
      %880 = vmatprep.subr.bf16.mxu0 0
      %881 = vmatpush1.bf16.msra.mxu0 0
      %882 = vmatprep.subr.bf16.mxu0 0
      %883 = vmatpush1.bf16.msra.mxu0 0
      %884 = vmatprep.subr.bf16.mxu0 0
      %885 = vmatpush1.bf16.msra.mxu0 0
      %886 = vmatprep.subr.bf16.mxu0 0
      %887 = vmatpush1.bf16.msra.mxu0 0
      %888 = vmatprep.subr.bf16.mxu0 0
      %889 = vmatpush1.bf16.msra.mxu0 0
      %890 = vmatprep.subr.bf16.mxu0 0
      %891 = vmatpush1.bf16.msra.mxu0 0
      %892 = vmatprep.subr.bf16.mxu0 0
      %893 = vmatpush1.bf16.msra.mxu0 0
      %894 = vmatprep.subr.bf16.mxu0 0
      %895 = vmatpush1.bf16.msra.mxu0 0
      %896 = vmatprep.subr.bf16.mxu0 0
      %897 = vmatpush1.bf16.msra.mxu0 0
      %898 = vmatprep.subr.bf16.mxu0 0
      %899 = vmatpush1.bf16.msra.mxu0 0
      %900 = vmatprep.subr.bf16.mxu0 0
      %901 = vmatpush1.bf16.msra.mxu0 0
      %902 = vmatprep.subr.bf16.mxu0 0
      %903 = vmatpush1.bf16.msra.mxu0 0
      %904 = vmatprep.subr.bf16.mxu0 0
      %905 = vmatpush1.bf16.msra.mxu0 0
      %906 = vmatprep.subr.bf16.mxu0 0
      %907 = vmatpush1.bf16.msra.mxu0 0
      %908 = vmatprep.mubr.bf16.mxu0 0
      %909 = vmatmul.mubr.bf16.gmra.mrb[0].mxu0 %v868
      %v910 = vpop.f32.mrb[0].mxu0
      %v911 = vadd.f32 0.0, %v910
      %v912 = vpop.f32.mrb[0].mxu0
      %v913 = vpop.f32.mrb[0].mxu0
      %v914 = vadd.f32 0.0, %v913
      %v915 = vpop.f32.mrb[0].mxu0
      %916 = vmatprep.mubr.bf16.mxu0 0
      %917 = vmatmul.mubr.bf16.gmra.mrb[0].mxu0 %v871
      %v918 = vpop.f32.mrb[0].mxu0
      %v919 = vadd.f32 0.0, %v918
      %v920 = vpop.f32.mrb[0].mxu0
      %v921 = vpop.f32.mrb[0].mxu0
      %v922 = vadd.f32 0.0, %v921
      %v923 = vpop.f32.mrb[0].mxu0
      %924 = vdwg.mxu0
      %v925 = vadd.f32 %v791, %v911
      %v926 = vadd.f32 %v792, %v914
      %v927 = vadd.f32 %v793, %v919
      %v928 = vadd.f32 %v794, %v922
      %v929 = vld [vmem:[%s716] sm:$0xf]
      %v930 = vld [vmem:[%s716 + $0x4] sm:$0x1]
      %v931 = vld [vmem:[%s716 + $0x8] sm:$0xf]
      %v932 = vld [vmem:[%s716 + $0xc] sm:$0x1]
      %v933 = vld [vmem:[%s716 + $0x10] sm:$0xf]
      %v934 = vld [vmem:[%s716 + $0x14] sm:$0x1]
      %v935 = vld [vmem:[%s716 + $0x18] sm:$0xf]
      %v936 = vld [vmem:[%s716 + $0x1c] sm:$0x1]
      %v938 = vshrl.u32 %v929, 16
      %v940 = vrot.slane %v938, 4
      %v941 = vshll.u32 %v929, 16
      %v943 = vrot.slane %v941, 5
      %v944 = vor.u32 %v940, %v943
      %v945 = vrot.slane %v944, 4
      %v947 = vshll.u32 %v930, 16
      %v949 = vrot.slane %v947, 5
      %v950 = vsel %vm372, %v945, %v949
      %v952 = vshrl.u32 %v931, 16
      %v954 = vrot.slane %v952, 4
      %v955 = vshll.u32 %v931, 16
      %v957 = vrot.slane %v955, 5
      %v958 = vor.u32 %v954, %v957
      %v959 = vrot.slane %v958, 4
      %v961 = vshll.u32 %v932, 16
      %v963 = vrot.slane %v961, 5
      %v964 = vsel %vm372, %v959, %v963
      %v966 = vshrl.u32 %v933, 16
      %v968 = vrot.slane %v966, 4
      %v969 = vshll.u32 %v933, 16
      %v971 = vrot.slane %v969, 5
      %v972 = vor.u32 %v968, %v971
      %v973 = vrot.slane %v972, 4
      %v975 = vshll.u32 %v934, 16
      %v977 = vrot.slane %v975, 5
      %v978 = vsel %vm372, %v973, %v977
      %v980 = vshrl.u32 %v935, 16
      %v982 = vrot.slane %v980, 4
      %v983 = vshll.u32 %v935, 16
      %v985 = vrot.slane %v983, 5
      %v986 = vor.u32 %v982, %v985
      %v987 = vrot.slane %v986, 4
      %v989 = vshll.u32 %v936, 16
      %v991 = vrot.slane %v989, 5
      %v992 = vsel %vm372, %v987, %v991
      %s993 = scalar_lea.vmem %s1, 14
      %v994 = vld [vmem:[%s993] sm:$0x3]
      %v995 = vunpack.c.l.b16 %v950
      %v996 = vunpack.c.l.b16 %v964
      %v997 = vunpack.c.l.b16 %v978
      %v998 = vunpack.c.l.b16 %v992
      %v999 = vpack.c.b16 %v996, %v995
      %v1000 = vpack.c.b16 %v998, %v997
      %v1002 = vsel %vm234, %v999, 0
      %v1005 = vsel %vm234, %v1000, 0
      %v1008 = vsel %vm241, %v994, 0
      %1010 = vmatprep.subr.bf16.mxu0 0
      %1011 = vmatpush1.bf16.msra.mxu0 %v1008
      %1012 = vmatprep.subr.bf16.mxu0 0
      %1013 = vmatpush1.bf16.msra.mxu0 0
      %1014 = vmatprep.subr.bf16.mxu0 0
      %1015 = vmatpush1.bf16.msra.mxu0 0
      %1016 = vmatprep.subr.bf16.mxu0 0
      %1017 = vmatpush1.bf16.msra.mxu0 0
      %1018 = vmatprep.subr.bf16.mxu0 0
      %1019 = vmatpush1.bf16.msra.mxu0 0
      %1020 = vmatprep.subr.bf16.mxu0 0
      %1021 = vmatpush1.bf16.msra.mxu0 0
      %1022 = vmatprep.subr.bf16.mxu0 0
      %1023 = vmatpush1.bf16.msra.mxu0 0
      %1024 = vmatprep.subr.bf16.mxu0 0
      %1025 = vmatpush1.bf16.msra.mxu0 0
      %1026 = vmatprep.subr.bf16.mxu0 0
      %1027 = vmatpush1.bf16.msra.mxu0 0
      %1028 = vmatprep.subr.bf16.mxu0 0
      %1029 = vmatpush1.bf16.msra.mxu0 0
      %1030 = vmatprep.subr.bf16.mxu0 0
      %1031 = vmatpush1.bf16.msra.mxu0 0
      %1032 = vmatprep.subr.bf16.mxu0 0
      %1033 = vmatpush1.bf16.msra.mxu0 0
      %1034 = vmatprep.subr.bf16.mxu0 0
      %1035 = vmatpush1.bf16.msra.mxu0 0
      %1036 = vmatprep.subr.bf16.mxu0 0
      %1037 = vmatpush1.bf16.msra.mxu0 0
      %1038 = vmatprep.subr.bf16.mxu0 0
      %1039 = vmatpush1.bf16.msra.mxu0 0
      %1040 = vmatprep.subr.bf16.mxu0 0
      %1041 = vmatpush1.bf16.msra.mxu0 0
      %1042 = vmatprep.mubr.bf16.mxu0 0
      %1043 = vmatmul.mubr.bf16.gmra.mrb[0].mxu0 %v1002
      %v1044 = vpop.f32.mrb[0].mxu0
      %v1045 = vadd.f32 0.0, %v1044
      %v1046 = vpop.f32.mrb[0].mxu0
      %v1047 = vpop.f32.mrb[0].mxu0
      %v1048 = vadd.f32 0.0, %v1047
      %v1049 = vpop.f32.mrb[0].mxu0
      %1050 = vmatprep.mubr.bf16.mxu0 0
      %1051 = vmatmul.mubr.bf16.gmra.mrb[0].mxu0 %v1005
      %v1052 = vpop.f32.mrb[0].mxu0
      %v1053 = vadd.f32 0.0, %v1052
      %v1054 = vpop.f32.mrb[0].mxu0
      %v1055 = vpop.f32.mrb[0].mxu0
      %v1056 = vadd.f32 0.0, %v1055
      %v1057 = vpop.f32.mrb[0].mxu0
      %1058 = vdwg.mxu0
      %v1059 = vadd.f32 %v925, %v1045
      %v1060 = vadd.f32 %v926, %v1048
      %v1061 = vadd.f32 %v927, %v1053
      %v1062 = vadd.f32 %v928, %v1056
      %s1063 = sadd.s32 %s206, 1
      %s1064 = smul.u32 %s1063, 2
      %s1065 = smul.addr %s1064, 4
      %s1066 = scalar_lea.vmem %s190, %s1065
      %v1067 = vld [vmem:[%s1066] sm:$0xf]
      %v1068 = vld [vmem:[%s1066 + $0x8] sm:$0xf]
      %v1069 = vld [vmem:[%s1066 + $0x10] sm:$0xf]
      %v1070 = vld [vmem:[%s1066 + $0x18] sm:$0xf]
      %s1071 = scalar_lea.vmem %s1, 16
      %v1072 = vld [vmem:[%s1071] sm:$0x3]
      %v1077 = vunpack.c.l.b16 %v1067
      %v1078 = vunpack.c.l.b16 %v1068
      %v1079 = vunpack.c.l.b16 %v1069
      %v1080 = vunpack.c.l.b16 %v1070
      %v1081 = vpack.c.b16 %v1078, %v1077
      %v1082 = vpack.c.b16 %v1080, %v1079
      %v1084 = vsel %vm234, %v1081, 0
      %v1087 = vsel %vm234, %v1082, 0
      %v1090 = vsel %vm241, %v1072, 0
      %1092 = vmatprep.subr.bf16.mxu0 0
      %1093 = vmatpush1.bf16.msra.mxu0 %v1090
      %1094 = vmatprep.subr.bf16.mxu0 0
      %1095 = vmatpush1.bf16.msra.mxu0 0
      %1096 = vmatprep.subr.bf16.mxu0 0
      %1097 = vmatpush1.bf16.msra.mxu0 0
      %1098 = vmatprep.subr.bf16.mxu0 0
      %1099 = vmatpush1.bf16.msra.mxu0 0
      %1100 = vmatprep.subr.bf16.mxu0 0
      %1101 = vmatpush1.bf16.msra.mxu0 0
      %1102 = vmatprep.subr.bf16.mxu0 0
      %1103 = vmatpush1.bf16.msra.mxu0 0
      %1104 = vmatprep.subr.bf16.mxu0 0
      %1105 = vmatpush1.bf16.msra.mxu0 0
      %1106 = vmatprep.subr.bf16.mxu0 0
      %1107 = vmatpush1.bf16.msra.mxu0 0
      %1108 = vmatprep.subr.bf16.mxu0 0
      %1109 = vmatpush1.bf16.msra.mxu0 0
      %1110 = vmatprep.subr.bf16.mxu0 0
      %1111 = vmatpush1.bf16.msra.mxu0 0
      %1112 = vmatprep.subr.bf16.mxu0 0
      %1113 = vmatpush1.bf16.msra.mxu0 0
      %1114 = vmatprep.subr.bf16.mxu0 0
      %1115 = vmatpush1.bf16.msra.mxu0 0
      %1116 = vmatprep.subr.bf16.mxu0 0
      %1117 = vmatpush1.bf16.msra.mxu0 0
      %1118 = vmatprep.subr.bf16.mxu0 0
      %1119 = vmatpush1.bf16.msra.mxu0 0
      %1120 = vmatprep.subr.bf16.mxu0 0
      %1121 = vmatpush1.bf16.msra.mxu0 0
      %1122 = vmatprep.subr.bf16.mxu0 0
      %1123 = vmatpush1.bf16.msra.mxu0 0
      %1124 = vmatprep.mubr.bf16.mxu0 0
      %1125 = vmatmul.mubr.bf16.gmra.mrb[0].mxu0 %v1084
      %v1126 = vpop.f32.mrb[0].mxu0
      %v1127 = vadd.f32 0.0, %v1126
      %v1128 = vpop.f32.mrb[0].mxu0
      %v1129 = vpop.f32.mrb[0].mxu0
      %v1130 = vadd.f32 0.0, %v1129
      %v1131 = vpop.f32.mrb[0].mxu0
      %1132 = vmatprep.mubr.bf16.mxu0 0
      %1133 = vmatmul.mubr.bf16.gmra.mrb[0].mxu0 %v1087
      %v1134 = vpop.f32.mrb[0].mxu0
      %v1135 = vadd.f32 0.0, %v1134
      %v1136 = vpop.f32.mrb[0].mxu0
      %v1137 = vpop.f32.mrb[0].mxu0
      %v1138 = vadd.f32 0.0, %v1137
      %v1139 = vpop.f32.mrb[0].mxu0
      %1140 = vdwg.mxu0
      %v1141 = vadd.f32 %v1059, %v1127
      %v1142 = vadd.f32 %v1060, %v1130
      %v1143 = vadd.f32 %v1061, %v1135
      %v1144 = vadd.f32 %v1062, %v1138
      %s1145 = sadd.s32 %s1064, 18
      %s1146 = smul.addr %s1145, 4
      %s1147 = scalar_lea.vmem %s190, %s1146
      %v1148 = vld [vmem:[%s1147] sm:$0xf]
      %v1149 = vld [vmem:[%s1147 + $0x8] sm:$0xf]
      %v1150 = vld [vmem:[%s1147 + $0x10] sm:$0xf]
      %v1151 = vld [vmem:[%s1147 + $0x18] sm:$0xf]
      %s1152 = scalar_lea.vmem %s1, 18
      %v1153 = vld [vmem:[%s1152] sm:$0x3]
      %v1158 = vunpack.c.l.b16 %v1148
      %v1159 = vunpack.c.l.b16 %v1149
      %v1160 = vunpack.c.l.b16 %v1150
      %v1161 = vunpack.c.l.b16 %v1151
      %v1162 = vpack.c.b16 %v1159, %v1158
      %v1163 = vpack.c.b16 %v1161, %v1160
      %v1165 = vsel %vm234, %v1162, 0
      %v1168 = vsel %vm234, %v1163, 0
      %v1171 = vsel %vm241, %v1153, 0
      %1173 = vmatprep.subr.bf16.mxu0 0
      %1174 = vmatpush1.bf16.msra.mxu0 %v1171
      %1175 = vmatprep.subr.bf16.mxu0 0
      %1176 = vmatpush1.bf16.msra.mxu0 0
      %1177 = vmatprep.subr.bf16.mxu0 0
      %1178 = vmatpush1.bf16.msra.mxu0 0
      %1179 = vmatprep.subr.bf16.mxu0 0
      %1180 = vmatpush1.bf16.msra.mxu0 0
      %1181 = vmatprep.subr.bf16.mxu0 0
      %1182 = vmatpush1.bf16.msra.mxu0 0
      %1183 = vmatprep.subr.bf16.mxu0 0
      %1184 = vmatpush1.bf16.msra.mxu0 0
      %1185 = vmatprep.subr.bf16.mxu0 0
      %1186 = vmatpush1.bf16.msra.mxu0 0
      %1187 = vmatprep.subr.bf16.mxu0 0
      %1188 = vmatpush1.bf16.msra.mxu0 0
      %1189 = vmatprep.subr.bf16.mxu0 0
      %1190 = vmatpush1.bf16.msra.mxu0 0
      %1191 = vmatprep.subr.bf16.mxu0 0
      %1192 = vmatpush1.bf16.msra.mxu0 0
      %1193 = vmatprep.subr.bf16.mxu0 0
      %1194 = vmatpush1.bf16.msra.mxu0 0
      %1195 = vmatprep.subr.bf16.mxu0 0
      %1196 = vmatpush1.bf16.msra.mxu0 0
      %1197 = vmatprep.subr.bf16.mxu0 0
      %1198 = vmatpush1.bf16.msra.mxu0 0
      %1199 = vmatprep.subr.bf16.mxu0 0
      %1200 = vmatpush1.bf16.msra.mxu0 0
      %1201 = vmatprep.subr.bf16.mxu0 0
      %1202 = vmatpush1.bf16.msra.mxu0 0
      %1203 = vmatprep.subr.bf16.mxu0 0
      %1204 = vmatpush1.bf16.msra.mxu0 0
      %1205 = vmatprep.mubr.bf16.mxu0 0
      %1206 = vmatmul.mubr.bf16.gmra.mrb[0].mxu0 %v1165
      %v1207 = vpop.f32.mrb[0].mxu0
      %v1208 = vadd.f32 0.0, %v1207
      %v1209 = vpop.f32.mrb[0].mxu0
      %v1210 = vpop.f32.mrb[0].mxu0
      %v1211 = vadd.f32 0.0, %v1210
      %v1212 = vpop.f32.mrb[0].mxu0
      %1213 = vmatprep.mubr.bf16.mxu0 0
      %1214 = vmatmul.mubr.bf16.gmra.mrb[0].mxu0 %v1168
      %v1215 = vpop.f32.mrb[0].mxu0
      %v1216 = vadd.f32 0.0, %v1215
      %v1217 = vpop.f32.mrb[0].mxu0
      %v1218 = vpop.f32.mrb[0].mxu0
      %v1219 = vadd.f32 0.0, %v1218
      %v1220 = vpop.f32.mrb[0].mxu0
      %1221 = vdwg.mxu0
      %v1222 = vadd.f32 %v1141, %v1208
      %v1223 = vadd.f32 %v1142, %v1211
      %v1224 = vadd.f32 %v1143, %v1216
      %v1225 = vadd.f32 %v1144, %v1219
      %v1226 = vld [vmem:[%s1066] sm:$0xf]
      %v1227 = vld [vmem:[%s1066 + $0x4] sm:$0x1]
      %v1228 = vld [vmem:[%s1066 + $0x8] sm:$0xf]
      %v1229 = vld [vmem:[%s1066 + $0xc] sm:$0x1]
      %v1230 = vld [vmem:[%s1066 + $0x10] sm:$0xf]
      %v1231 = vld [vmem:[%s1066 + $0x14] sm:$0x1]
      %v1232 = vld [vmem:[%s1066 + $0x18] sm:$0xf]
      %v1233 = vld [vmem:[%s1066 + $0x1c] sm:$0x1]
      %v1235 = vshrl.u32 %v1226, 16
      %v1237 = vrot.slane %v1235, 4
      %v1238 = vshll.u32 %v1226, 16
      %v1240 = vrot.slane %v1238, 5
      %v1241 = vor.u32 %v1237, %v1240
      %v1242 = vrot.slane %v1241, 4
      %v1244 = vshll.u32 %v1227, 16
      %v1246 = vrot.slane %v1244, 5
      %v1247 = vsel %vm372, %v1242, %v1246
      %v1249 = vshrl.u32 %v1228, 16
      %v1251 = vrot.slane %v1249, 4
      %v1252 = vshll.u32 %v1228, 16
      %v1254 = vrot.slane %v1252, 5
      %v1255 = vor.u32 %v1251, %v1254
      %v1256 = vrot.slane %v1255, 4
      %v1258 = vshll.u32 %v1229, 16
      %v1260 = vrot.slane %v1258, 5
      %v1261 = vsel %vm372, %v1256, %v1260
      %v1263 = vshrl.u32 %v1230, 16
      %v1265 = vrot.slane %v1263, 4
      %v1266 = vshll.u32 %v1230, 16
      %v1268 = vrot.slane %v1266, 5
      %v1269 = vor.u32 %v1265, %v1268
      %v1270 = vrot.slane %v1269, 4
      %v1272 = vshll.u32 %v1231, 16
      %v1274 = vrot.slane %v1272, 5
      %v1275 = vsel %vm372, %v1270, %v1274
      %v1277 = vshrl.u32 %v1232, 16
      %v1279 = vrot.slane %v1277, 4
      %v1280 = vshll.u32 %v1232, 16
      %v1282 = vrot.slane %v1280, 5
      %v1283 = vor.u32 %v1279, %v1282
      %v1284 = vrot.slane %v1283, 4
      %v1286 = vshll.u32 %v1233, 16
      %v1288 = vrot.slane %v1286, 5
      %v1289 = vsel %vm372, %v1284, %v1288
      %s1290 = scalar_lea.vmem %s1, 20
      %v1291 = vld [vmem:[%s1290] sm:$0x3]
      %v1292 = vunpack.c.l.b16 %v1247
      %v1293 = vunpack.c.l.b16 %v1261
      %v1294 = vunpack.c.l.b16 %v1275
      %v1295 = vunpack.c.l.b16 %v1289
      %v1296 = vpack.c.b16 %v1293, %v1292
      %v1297 = vpack.c.b16 %v1295, %v1294
      %v1299 = vsel %vm234, %v1296, 0
      %v1302 = vsel %vm234, %v1297, 0
      %v1305 = vsel %vm241, %v1291, 0
      %1307 = vmatprep.subr.bf16.mxu0 0
      %1308 = vmatpush1.bf16.msra.mxu0 %v1305
      %1309 = vmatprep.subr.bf16.mxu0 0
      %1310 = vmatpush1.bf16.msra.mxu0 0
      %1311 = vmatprep.subr.bf16.mxu0 0
      %1312 = vmatpush1.bf16.msra.mxu0 0
      %1313 = vmatprep.subr.bf16.mxu0 0
      %1314 = vmatpush1.bf16.msra.mxu0 0
      %1315 = vmatprep.subr.bf16.mxu0 0
      %1316 = vmatpush1.bf16.msra.mxu0 0
      %1317 = vmatprep.subr.bf16.mxu0 0
      %1318 = vmatpush1.bf16.msra.mxu0 0
      %1319 = vmatprep.subr.bf16.mxu0 0
      %1320 = vmatpush1.bf16.msra.mxu0 0
      %1321 = vmatprep.subr.bf16.mxu0 0
      %1322 = vmatpush1.bf16.msra.mxu0 0
      %1323 = vmatprep.subr.bf16.mxu0 0
      %1324 = vmatpush1.bf16.msra.mxu0 0
      %1325 = vmatprep.subr.bf16.mxu0 0
      %1326 = vmatpush1.bf16.msra.mxu0 0
      %1327 = vmatprep.subr.bf16.mxu0 0
      %1328 = vmatpush1.bf16.msra.mxu0 0
      %1329 = vmatprep.subr.bf16.mxu0 0
      %1330 = vmatpush1.bf16.msra.mxu0 0
      %1331 = vmatprep.subr.bf16.mxu0 0
      %1332 = vmatpush1.bf16.msra.mxu0 0
      %1333 = vmatprep.subr.bf16.mxu0 0
      %1334 = vmatpush1.bf16.msra.mxu0 0
      %1335 = vmatprep.subr.bf16.mxu0 0
      %1336 = vmatpush1.bf16.msra.mxu0 0
      %1337 = vmatprep.subr.bf16.mxu0 0
      %1338 = vmatpush1.bf16.msra.mxu0 0
      %1339 = vmatprep.mubr.bf16.mxu0 0
      %1340 = vmatmul.mubr.bf16.gmra.mrb[0].mxu0 %v1299
      %v1341 = vpop.f32.mrb[0].mxu0
      %v1342 = vadd.f32 0.0, %v1341
      %v1343 = vpop.f32.mrb[0].mxu0
      %v1344 = vpop.f32.mrb[0].mxu0
      %v1345 = vadd.f32 0.0, %v1344
      %v1346 = vpop.f32.mrb[0].mxu0
      %1347 = vmatprep.mubr.bf16.mxu0 0
      %1348 = vmatmul.mubr.bf16.gmra.mrb[0].mxu0 %v1302
      %v1349 = vpop.f32.mrb[0].mxu0
      %v1350 = vadd.f32 0.0, %v1349
      %v1351 = vpop.f32.mrb[0].mxu0
      %v1352 = vpop.f32.mrb[0].mxu0
      %v1353 = vadd.f32 0.0, %v1352
      %v1354 = vpop.f32.mrb[0].mxu0
      %1355 = vdwg.mxu0
      %v1356 = vadd.f32 %v1222, %v1342
      %v1357 = vadd.f32 %v1223, %v1345
      %v1358 = vadd.f32 %v1224, %v1350
      %v1359 = vadd.f32 %v1225, %v1353
      %v1360 = vld [vmem:[%s1147] sm:$0xf]
      %v1361 = vld [vmem:[%s1147 + $0x4] sm:$0x1]
      %v1362 = vld [vmem:[%s1147 + $0x8] sm:$0xf]
      %v1363 = vld [vmem:[%s1147 + $0xc] sm:$0x1]
      %v1364 = vld [vmem:[%s1147 + $0x10] sm:$0xf]
      %v1365 = vld [vmem:[%s1147 + $0x14] sm:$0x1]
      %v1366 = vld [vmem:[%s1147 + $0x18] sm:$0xf]
      %v1367 = vld [vmem:[%s1147 + $0x1c] sm:$0x1]
      %v1369 = vshrl.u32 %v1360, 16
      %v1371 = vrot.slane %v1369, 4
      %v1372 = vshll.u32 %v1360, 16
      %v1374 = vrot.slane %v1372, 5
      %v1375 = vor.u32 %v1371, %v1374
      %v1376 = vrot.slane %v1375, 4
      %v1378 = vshll.u32 %v1361, 16
      %v1380 = vrot.slane %v1378, 5
      %v1381 = vsel %vm372, %v1376, %v1380
      %v1383 = vshrl.u32 %v1362, 16
      %v1385 = vrot.slane %v1383, 4
      %v1386 = vshll.u32 %v1362, 16
      %v1388 = vrot.slane %v1386, 5
      %v1389 = vor.u32 %v1385, %v1388
      %v1390 = vrot.slane %v1389, 4
      %v1392 = vshll.u32 %v1363, 16
      %v1394 = vrot.slane %v1392, 5
      %v1395 = vsel %vm372, %v1390, %v1394
      %v1397 = vshrl.u32 %v1364, 16
      %v1399 = vrot.slane %v1397, 4
      %v1400 = vshll.u32 %v1364, 16
      %v1402 = vrot.slane %v1400, 5
      %v1403 = vor.u32 %v1399, %v1402
      %v1404 = vrot.slane %v1403, 4
      %v1406 = vshll.u32 %v1365, 16
      %v1408 = vrot.slane %v1406, 5
      %v1409 = vsel %vm372, %v1404, %v1408
      %v1411 = vshrl.u32 %v1366, 16
      %v1413 = vrot.slane %v1411, 4
      %v1414 = vshll.u32 %v1366, 16
      %v1416 = vrot.slane %v1414, 5
      %v1417 = vor.u32 %v1413, %v1416
      %v1418 = vrot.slane %v1417, 4
      %v1420 = vshll.u32 %v1367, 16
      %v1422 = vrot.slane %v1420, 5
      %v1423 = vsel %vm372, %v1418, %v1422
      %s1424 = scalar_lea.vmem %s1, 22
      %v1425 = vld [vmem:[%s1424] sm:$0x3]
      %v1426 = vunpack.c.l.b16 %v1381
      %v1427 = vunpack.c.l.b16 %v1395
      %v1428 = vunpack.c.l.b16 %v1409
      %v1429 = vunpack.c.l.b16 %v1423
      %v1430 = vpack.c.b16 %v1427, %v1426
      %v1431 = vpack.c.b16 %v1429, %v1428
      %v1433 = vsel %vm234, %v1430, 0
      %v1436 = vsel %vm234, %v1431, 0
      %v1439 = vsel %vm241, %v1425, 0
      %1441 = vmatprep.subr.bf16.mxu0 0
      %1442 = vmatpush1.bf16.msra.mxu0 %v1439
      %1443 = vmatprep.subr.bf16.mxu0 0
      %1444 = vmatpush1.bf16.msra.mxu0 0
      %1445 = vmatprep.subr.bf16.mxu0 0
      %1446 = vmatpush1.bf16.msra.mxu0 0
      %1447 = vmatprep.subr.bf16.mxu0 0
      %1448 = vmatpush1.bf16.msra.mxu0 0
      %1449 = vmatprep.subr.bf16.mxu0 0
      %1450 = vmatpush1.bf16.msra.mxu0 0
      %1451 = vmatprep.subr.bf16.mxu0 0
      %1452 = vmatpush1.bf16.msra.mxu0 0
      %1453 = vmatprep.subr.bf16.mxu0 0
      %1454 = vmatpush1.bf16.msra.mxu0 0
      %1455 = vmatprep.subr.bf16.mxu0 0
      %1456 = vmatpush1.bf16.msra.mxu0 0
      %1457 = vmatprep.subr.bf16.mxu0 0
      %1458 = vmatpush1.bf16.msra.mxu0 0
      %1459 = vmatprep.subr.bf16.mxu0 0
      %1460 = vmatpush1.bf16.msra.mxu0 0
      %1461 = vmatprep.subr.bf16.mxu0 0
      %1462 = vmatpush1.bf16.msra.mxu0 0
      %1463 = vmatprep.subr.bf16.mxu0 0
      %1464 = vmatpush1.bf16.msra.mxu0 0
      %1465 = vmatprep.subr.bf16.mxu0 0
      %1466 = vmatpush1.bf16.msra.mxu0 0
      %1467 = vmatprep.subr.bf16.mxu0 0
      %1468 = vmatpush1.bf16.msra.mxu0 0
      %1469 = vmatprep.subr.bf16.mxu0 0
      %1470 = vmatpush1.bf16.msra.mxu0 0
      %1471 = vmatprep.subr.bf16.mxu0 0
      %1472 = vmatpush1.bf16.msra.mxu0 0
      %1473 = vmatprep.mubr.bf16.mxu0 0
      %1474 = vmatmul.mubr.bf16.gmra.mrb[0].mxu0 %v1433
      %v1475 = vpop.f32.mrb[0].mxu0
      %v1476 = vadd.f32 0.0, %v1475
      %v1477 = vpop.f32.mrb[0].mxu0
      %v1478 = vpop.f32.mrb[0].mxu0
      %v1479 = vadd.f32 0.0, %v1478
      %v1480 = vpop.f32.mrb[0].mxu0
      %1481 = vmatprep.mubr.bf16.mxu0 0
      %1482 = vmatmul.mubr.bf16.gmra.mrb[0].mxu0 %v1436
      %v1483 = vpop.f32.mrb[0].mxu0
      %v1484 = vadd.f32 0.0, %v1483
      %v1485 = vpop.f32.mrb[0].mxu0
      %v1486 = vpop.f32.mrb[0].mxu0
      %v1487 = vadd.f32 0.0, %v1486
      %v1488 = vpop.f32.mrb[0].mxu0
      %1489 = vdwg.mxu0
      %v1490 = vadd.f32 %v1356, %v1476
      %v1491 = vadd.f32 %v1357, %v1479
      %v1492 = vadd.f32 %v1358, %v1484
      %v1493 = vadd.f32 %v1359, %v1487
      %s1494 = sadd.s32 %s1064, 36
      %s1495 = smul.addr %s1494, 4
      %s1496 = scalar_lea.vmem %s190, %s1495
      %v1497 = vld [vmem:[%s1496] sm:$0xf]
      %v1498 = vld [vmem:[%s1496 + $0x8] sm:$0xf]
      %v1499 = vld [vmem:[%s1496 + $0x10] sm:$0xf]
      %v1500 = vld [vmem:[%s1496 + $0x18] sm:$0xf]
      %s1501 = scalar_lea.vmem %s1, 24
      %v1502 = vld [vmem:[%s1501] sm:$0x3]
      %v1507 = vunpack.c.l.b16 %v1497
      %v1508 = vunpack.c.l.b16 %v1498
      %v1509 = vunpack.c.l.b16 %v1499
      %v1510 = vunpack.c.l.b16 %v1500
      %v1511 = vpack.c.b16 %v1508, %v1507
      %v1512 = vpack.c.b16 %v1510, %v1509
      %v1514 = vsel %vm234, %v1511, 0
      %v1517 = vsel %vm234, %v1512, 0
      %v1520 = vsel %vm241, %v1502, 0
      %1522 = vmatprep.subr.bf16.mxu0 0
      %1523 = vmatpush1.bf16.msra.mxu0 %v1520
      %1524 = vmatprep.subr.bf16.mxu0 0
      %1525 = vmatpush1.bf16.msra.mxu0 0
      %1526 = vmatprep.subr.bf16.mxu0 0
      %1527 = vmatpush1.bf16.msra.mxu0 0
      %1528 = vmatprep.subr.bf16.mxu0 0
      %1529 = vmatpush1.bf16.msra.mxu0 0
      %1530 = vmatprep.subr.bf16.mxu0 0
      %1531 = vmatpush1.bf16.msra.mxu0 0
      %1532 = vmatprep.subr.bf16.mxu0 0
      %1533 = vmatpush1.bf16.msra.mxu0 0
      %1534 = vmatprep.subr.bf16.mxu0 0
      %1535 = vmatpush1.bf16.msra.mxu0 0
      %1536 = vmatprep.subr.bf16.mxu0 0
      %1537 = vmatpush1.bf16.msra.mxu0 0
      %1538 = vmatprep.subr.bf16.mxu0 0
      %1539 = vmatpush1.bf16.msra.mxu0 0
      %1540 = vmatprep.subr.bf16.mxu0 0
      %1541 = vmatpush1.bf16.msra.mxu0 0
      %1542 = vmatprep.subr.bf16.mxu0 0
      %1543 = vmatpush1.bf16.msra.mxu0 0
      %1544 = vmatprep.subr.bf16.mxu0 0
      %1545 = vmatpush1.bf16.msra.mxu0 0
      %1546 = vmatprep.subr.bf16.mxu0 0
      %1547 = vmatpush1.bf16.msra.mxu0 0
      %1548 = vmatprep.subr.bf16.mxu0 0
      %1549 = vmatpush1.bf16.msra.mxu0 0
      %1550 = vmatprep.subr.bf16.mxu0 0
      %1551 = vmatpush1.bf16.msra.mxu0 0
      %1552 = vmatprep.subr.bf16.mxu0 0
      %1553 = vmatpush1.bf16.msra.mxu0 0
      %1554 = vmatprep.mubr.bf16.mxu0 0
      %1555 = vmatmul.mubr.bf16.gmra.mrb[0].mxu0 %v1514
      %v1556 = vpop.f32.mrb[0].mxu0
      %v1557 = vadd.f32 0.0, %v1556
      %v1558 = vpop.f32.mrb[0].mxu0
      %v1559 = vpop.f32.mrb[0].mxu0
      %v1560 = vadd.f32 0.0, %v1559
      %v1561 = vpop.f32.mrb[0].mxu0
      %1562 = vmatprep.mubr.bf16.mxu0 0
      %1563 = vmatmul.mubr.bf16.gmra.mrb[0].mxu0 %v1517
      %v1564 = vpop.f32.mrb[0].mxu0
      %v1565 = vadd.f32 0.0, %v1564
      %v1566 = vpop.f32.mrb[0].mxu0
      %v1567 = vpop.f32.mrb[0].mxu0
      %v1568 = vadd.f32 0.0, %v1567
      %v1569 = vpop.f32.mrb[0].mxu0
      %1570 = vdwg.mxu0
      %v1571 = vadd.f32 %v1490, %v1557
      %v1572 = vadd.f32 %v1491, %v1560
      %v1573 = vadd.f32 %v1492, %v1565
      %v1574 = vadd.f32 %v1493, %v1568
      %s1575 = sadd.s32 %s1064, 54
      %s1576 = smul.addr %s1575, 4
      %s1577 = scalar_lea.vmem %s190, %s1576
      %v1578 = vld [vmem:[%s1577] sm:$0xf]
      %v1579 = vld [vmem:[%s1577 + $0x8] sm:$0xf]
      %v1580 = vld [vmem:[%s1577 + $0x10] sm:$0xf]
      %v1581 = vld [vmem:[%s1577 + $0x18] sm:$0xf]
      %s1582 = scalar_lea.vmem %s1, 26
      %v1583 = vld [vmem:[%s1582] sm:$0x3]
      %v1588 = vunpack.c.l.b16 %v1578
      %v1589 = vunpack.c.l.b16 %v1579
      %v1590 = vunpack.c.l.b16 %v1580
      %v1591 = vunpack.c.l.b16 %v1581
      %v1592 = vpack.c.b16 %v1589, %v1588
      %v1593 = vpack.c.b16 %v1591, %v1590
      %v1595 = vsel %vm234, %v1592, 0
      %v1598 = vsel %vm234, %v1593, 0
      %v1601 = vsel %vm241, %v1583, 0
      %1603 = vmatprep.subr.bf16.mxu0 0
      %1604 = vmatpush1.bf16.msra.mxu0 %v1601
      %1605 = vmatprep.subr.bf16.mxu0 0
      %1606 = vmatpush1.bf16.msra.mxu0 0
      %1607 = vmatprep.subr.bf16.mxu0 0
      %1608 = vmatpush1.bf16.msra.mxu0 0
      %1609 = vmatprep.subr.bf16.mxu0 0
      %1610 = vmatpush1.bf16.msra.mxu0 0
      %1611 = vmatprep.subr.bf16.mxu0 0
      %1612 = vmatpush1.bf16.msra.mxu0 0
      %1613 = vmatprep.subr.bf16.mxu0 0
      %1614 = vmatpush1.bf16.msra.mxu0 0
      %1615 = vmatprep.subr.bf16.mxu0 0
      %1616 = vmatpush1.bf16.msra.mxu0 0
      %1617 = vmatprep.subr.bf16.mxu0 0
      %1618 = vmatpush1.bf16.msra.mxu0 0
      %1619 = vmatprep.subr.bf16.mxu0 0
      %1620 = vmatpush1.bf16.msra.mxu0 0
      %1621 = vmatprep.subr.bf16.mxu0 0
      %1622 = vmatpush1.bf16.msra.mxu0 0
      %1623 = vmatprep.subr.bf16.mxu0 0
      %1624 = vmatpush1.bf16.msra.mxu0 0
      %1625 = vmatprep.subr.bf16.mxu0 0
      %1626 = vmatpush1.bf16.msra.mxu0 0
      %1627 = vmatprep.subr.bf16.mxu0 0
      %1628 = vmatpush1.bf16.msra.mxu0 0
      %1629 = vmatprep.subr.bf16.mxu0 0
      %1630 = vmatpush1.bf16.msra.mxu0 0
      %1631 = vmatprep.subr.bf16.mxu0 0
      %1632 = vmatpush1.bf16.msra.mxu0 0
      %1633 = vmatprep.subr.bf16.mxu0 0
      %1634 = vmatpush1.bf16.msra.mxu0 0
      %1635 = vmatprep.mubr.bf16.mxu0 0
      %1636 = vmatmul.mubr.bf16.gmra.mrb[0].mxu0 %v1595
      %v1637 = vpop.f32.mrb[0].mxu0
      %v1638 = vadd.f32 0.0, %v1637
      %v1639 = vpop.f32.mrb[0].mxu0
      %v1640 = vpop.f32.mrb[0].mxu0
      %v1641 = vadd.f32 0.0, %v1640
      %v1642 = vpop.f32.mrb[0].mxu0
      %1643 = vmatprep.mubr.bf16.mxu0 0
      %1644 = vmatmul.mubr.bf16.gmra.mrb[0].mxu0 %v1598
      %v1645 = vpop.f32.mrb[0].mxu0
      %v1646 = vadd.f32 0.0, %v1645
      %v1647 = vpop.f32.mrb[0].mxu0
      %v1648 = vpop.f32.mrb[0].mxu0
      %v1649 = vadd.f32 0.0, %v1648
      %v1650 = vpop.f32.mrb[0].mxu0
      %1651 = vdwg.mxu0
      %v1652 = vadd.f32 %v1571, %v1638
      %v1653 = vadd.f32 %v1572, %v1641
      %v1654 = vadd.f32 %v1573, %v1646
      %v1655 = vadd.f32 %v1574, %v1649
      %v1656 = vld [vmem:[%s1496] sm:$0xf]
      %v1657 = vld [vmem:[%s1496 + $0x4] sm:$0x1]
      %v1658 = vld [vmem:[%s1496 + $0x8] sm:$0xf]
      %v1659 = vld [vmem:[%s1496 + $0xc] sm:$0x1]
      %v1660 = vld [vmem:[%s1496 + $0x10] sm:$0xf]
      %v1661 = vld [vmem:[%s1496 + $0x14] sm:$0x1]
      %v1662 = vld [vmem:[%s1496 + $0x18] sm:$0xf]
      %v1663 = vld [vmem:[%s1496 + $0x1c] sm:$0x1]
      %v1665 = vshrl.u32 %v1656, 16
      %v1667 = vrot.slane %v1665, 4
      %v1668 = vshll.u32 %v1656, 16
      %v1670 = vrot.slane %v1668, 5
      %v1671 = vor.u32 %v1667, %v1670
      %v1672 = vrot.slane %v1671, 4
      %v1674 = vshll.u32 %v1657, 16
      %v1676 = vrot.slane %v1674, 5
      %v1677 = vsel %vm372, %v1672, %v1676
      %v1679 = vshrl.u32 %v1658, 16
      %v1681 = vrot.slane %v1679, 4
      %v1682 = vshll.u32 %v1658, 16
      %v1684 = vrot.slane %v1682, 5
      %v1685 = vor.u32 %v1681, %v1684
      %v1686 = vrot.slane %v1685, 4
      %v1688 = vshll.u32 %v1659, 16
      %v1690 = vrot.slane %v1688, 5
      %v1691 = vsel %vm372, %v1686, %v1690
      %v1693 = vshrl.u32 %v1660, 16
      %v1695 = vrot.slane %v1693, 4
      %v1696 = vshll.u32 %v1660, 16
      %v1698 = vrot.slane %v1696, 5
      %v1699 = vor.u32 %v1695, %v1698
      %v1700 = vrot.slane %v1699, 4
      %v1702 = vshll.u32 %v1661, 16
      %v1704 = vrot.slane %v1702, 5
      %v1705 = vsel %vm372, %v1700, %v1704
      %v1707 = vshrl.u32 %v1662, 16
      %v1709 = vrot.slane %v1707, 4
      %v1710 = vshll.u32 %v1662, 16
      %v1712 = vrot.slane %v1710, 5
      %v1713 = vor.u32 %v1709, %v1712
      %v1714 = vrot.slane %v1713, 4
      %v1716 = vshll.u32 %v1663, 16
      %v1718 = vrot.slane %v1716, 5
      %v1719 = vsel %vm372, %v1714, %v1718
      %s1720 = scalar_lea.vmem %s1, 28
      %v1721 = vld [vmem:[%s1720] sm:$0x3]
      %v1722 = vunpack.c.l.b16 %v1677
      %v1723 = vunpack.c.l.b16 %v1691
      %v1724 = vunpack.c.l.b16 %v1705
      %v1725 = vunpack.c.l.b16 %v1719
      %v1726 = vpack.c.b16 %v1723, %v1722
      %v1727 = vpack.c.b16 %v1725, %v1724
      %v1729 = vsel %vm234, %v1726, 0
      %v1732 = vsel %vm234, %v1727, 0
      %v1735 = vsel %vm241, %v1721, 0
      %1737 = vmatprep.subr.bf16.mxu0 0
      %1738 = vmatpush1.bf16.msra.mxu0 %v1735
      %1739 = vmatprep.subr.bf16.mxu0 0
      %1740 = vmatpush1.bf16.msra.mxu0 0
      %1741 = vmatprep.subr.bf16.mxu0 0
      %1742 = vmatpush1.bf16.msra.mxu0 0
      %1743 = vmatprep.subr.bf16.mxu0 0
      %1744 = vmatpush1.bf16.msra.mxu0 0
      %1745 = vmatprep.subr.bf16.mxu0 0
      %1746 = vmatpush1.bf16.msra.mxu0 0
      %1747 = vmatprep.subr.bf16.mxu0 0
      %1748 = vmatpush1.bf16.msra.mxu0 0
      %1749 = vmatprep.subr.bf16.mxu0 0
      %1750 = vmatpush1.bf16.msra.mxu0 0
      %1751 = vmatprep.subr.bf16.mxu0 0
      %1752 = vmatpush1.bf16.msra.mxu0 0
      %1753 = vmatprep.subr.bf16.mxu0 0
      %1754 = vmatpush1.bf16.msra.mxu0 0
      %1755 = vmatprep.subr.bf16.mxu0 0
      %1756 = vmatpush1.bf16.msra.mxu0 0
      %1757 = vmatprep.subr.bf16.mxu0 0
      %1758 = vmatpush1.bf16.msra.mxu0 0
      %1759 = vmatprep.subr.bf16.mxu0 0
      %1760 = vmatpush1.bf16.msra.mxu0 0
      %1761 = vmatprep.subr.bf16.mxu0 0
      %1762 = vmatpush1.bf16.msra.mxu0 0
      %1763 = vmatprep.subr.bf16.mxu0 0
      %1764 = vmatpush1.bf16.msra.mxu0 0
      %1765 = vmatprep.subr.bf16.mxu0 0
      %1766 = vmatpush1.bf16.msra.mxu0 0
      %1767 = vmatprep.subr.bf16.mxu0 0
      %1768 = vmatpush1.bf16.msra.mxu0 0
      %1769 = vmatprep.mubr.bf16.mxu0 0
      %1770 = vmatmul.mubr.bf16.gmra.mrb[0].mxu0 %v1729
      %v1771 = vpop.f32.mrb[0].mxu0
      %v1772 = vadd.f32 0.0, %v1771
      %v1773 = vpop.f32.mrb[0].mxu0
      %v1774 = vpop.f32.mrb[0].mxu0
      %v1775 = vadd.f32 0.0, %v1774
      %v1776 = vpop.f32.mrb[0].mxu0
      %1777 = vmatprep.mubr.bf16.mxu0 0
      %1778 = vmatmul.mubr.bf16.gmra.mrb[0].mxu0 %v1732
      %v1779 = vpop.f32.mrb[0].mxu0
      %v1780 = vadd.f32 0.0, %v1779
      %v1781 = vpop.f32.mrb[0].mxu0
      %v1782 = vpop.f32.mrb[0].mxu0
      %v1783 = vadd.f32 0.0, %v1782
      %v1784 = vpop.f32.mrb[0].mxu0
      %1785 = vdwg.mxu0
      %v1786 = vadd.f32 %v1652, %v1772
      %v1787 = vadd.f32 %v1653, %v1775
      %v1788 = vadd.f32 %v1654, %v1780
      %v1789 = vadd.f32 %v1655, %v1783
      %v1790 = vld [vmem:[%s1577] sm:$0xf]
      %v1791 = vld [vmem:[%s1577 + $0x4] sm:$0x1]
      %v1792 = vld [vmem:[%s1577 + $0x8] sm:$0xf]
      %v1793 = vld [vmem:[%s1577 + $0xc] sm:$0x1]
      %v1794 = vld [vmem:[%s1577 + $0x10] sm:$0xf]
      %v1795 = vld [vmem:[%s1577 + $0x14] sm:$0x1]
      %v1796 = vld [vmem:[%s1577 + $0x18] sm:$0xf]
      %v1797 = vld [vmem:[%s1577 + $0x1c] sm:$0x1]
      %v1799 = vshrl.u32 %v1790, 16
      %v1801 = vrot.slane %v1799, 4
      %v1802 = vshll.u32 %v1790, 16
      %v1804 = vrot.slane %v1802, 5
      %v1805 = vor.u32 %v1801, %v1804
      %v1806 = vrot.slane %v1805, 4
      %v1808 = vshll.u32 %v1791, 16
      %v1810 = vrot.slane %v1808, 5
      %v1811 = vsel %vm372, %v1806, %v1810
      %v1813 = vshrl.u32 %v1792, 16
      %v1815 = vrot.slane %v1813, 4
      %v1816 = vshll.u32 %v1792, 16
      %v1818 = vrot.slane %v1816, 5
      %v1819 = vor.u32 %v1815, %v1818
      %v1820 = vrot.slane %v1819, 4
      %v1822 = vshll.u32 %v1793, 16
      %v1824 = vrot.slane %v1822, 5
      %v1825 = vsel %vm372, %v1820, %v1824
      %v1827 = vshrl.u32 %v1794, 16
      %v1829 = vrot.slane %v1827, 4
      %v1830 = vshll.u32 %v1794, 16
      %v1832 = vrot.slane %v1830, 5
      %v1833 = vor.u32 %v1829, %v1832
      %v1834 = vrot.slane %v1833, 4
      %v1836 = vshll.u32 %v1795, 16
      %v1838 = vrot.slane %v1836, 5
      %v1839 = vsel %vm372, %v1834, %v1838
      %v1841 = vshrl.u32 %v1796, 16
      %v1843 = vrot.slane %v1841, 4
      %v1844 = vshll.u32 %v1796, 16
      %v1846 = vrot.slane %v1844, 5
      %v1847 = vor.u32 %v1843, %v1846
      %v1848 = vrot.slane %v1847, 4
      %v1850 = vshll.u32 %v1797, 16
      %v1852 = vrot.slane %v1850, 5
      %v1853 = vsel %vm372, %v1848, %v1852
      %s1854 = scalar_lea.vmem %s1, 30
      %v1855 = vld [vmem:[%s1854] sm:$0x3]
      %v1856 = vunpack.c.l.b16 %v1811
      %v1857 = vunpack.c.l.b16 %v1825
      %v1858 = vunpack.c.l.b16 %v1839
      %v1859 = vunpack.c.l.b16 %v1853
      %v1860 = vpack.c.b16 %v1857, %v1856
      %v1861 = vpack.c.b16 %v1859, %v1858
      %v1863 = vsel %vm234, %v1860, 0
      %v1866 = vsel %vm234, %v1861, 0
      %v1869 = vsel %vm241, %v1855, 0
      %1871 = vmatprep.subr.bf16.mxu0 0
      %1872 = vmatpush1.bf16.msra.mxu0 %v1869
      %1873 = vmatprep.subr.bf16.mxu0 0
      %1874 = vmatpush1.bf16.msra.mxu0 0
      %1875 = vmatprep.subr.bf16.mxu0 0
      %1876 = vmatpush1.bf16.msra.mxu0 0
      %1877 = vmatprep.subr.bf16.mxu0 0
      %1878 = vmatpush1.bf16.msra.mxu0 0
      %1879 = vmatprep.subr.bf16.mxu0 0
      %1880 = vmatpush1.bf16.msra.mxu0 0
      %1881 = vmatprep.subr.bf16.mxu0 0
      %1882 = vmatpush1.bf16.msra.mxu0 0
      %1883 = vmatprep.subr.bf16.mxu0 0
      %1884 = vmatpush1.bf16.msra.mxu0 0
      %1885 = vmatprep.subr.bf16.mxu0 0
      %1886 = vmatpush1.bf16.msra.mxu0 0
      %1887 = vmatprep.subr.bf16.mxu0 0
      %1888 = vmatpush1.bf16.msra.mxu0 0
      %1889 = vmatprep.subr.bf16.mxu0 0
      %1890 = vmatpush1.bf16.msra.mxu0 0
      %1891 = vmatprep.subr.bf16.mxu0 0
      %1892 = vmatpush1.bf16.msra.mxu0 0
      %1893 = vmatprep.subr.bf16.mxu0 0
      %1894 = vmatpush1.bf16.msra.mxu0 0
      %1895 = vmatprep.subr.bf16.mxu0 0
      %1896 = vmatpush1.bf16.msra.mxu0 0
      %1897 = vmatprep.subr.bf16.mxu0 0
      %1898 = vmatpush1.bf16.msra.mxu0 0
      %1899 = vmatprep.subr.bf16.mxu0 0
      %1900 = vmatpush1.bf16.msra.mxu0 0
      %1901 = vmatprep.subr.bf16.mxu0 0
      %1902 = vmatpush1.bf16.msra.mxu0 0
      %1903 = vmatprep.mubr.bf16.mxu0 0
      %1904 = vmatmul.mubr.bf16.gmra.mrb[0].mxu0 %v1863
      %v1905 = vpop.f32.mrb[0].mxu0
      %v1906 = vadd.f32 0.0, %v1905
      %v1907 = vpop.f32.mrb[0].mxu0
      %v1908 = vpop.f32.mrb[0].mxu0
      %v1909 = vadd.f32 0.0, %v1908
      %v1910 = vpop.f32.mrb[0].mxu0
      %1911 = vmatprep.mubr.bf16.mxu0 0
      %1912 = vmatmul.mubr.bf16.gmra.mrb[0].mxu0 %v1866
      %v1913 = vpop.f32.mrb[0].mxu0
      %v1914 = vadd.f32 0.0, %v1913
      %v1915 = vpop.f32.mrb[0].mxu0
      %v1916 = vpop.f32.mrb[0].mxu0
      %v1917 = vadd.f32 0.0, %v1916
      %v1918 = vpop.f32.mrb[0].mxu0
      %1919 = vdwg.mxu0
      %v1920 = vadd.f32 %v1786, %v1906
      %v1921 = vadd.f32 %v1787, %v1909
      %v1922 = vadd.f32 %v1788, %v1914
      %v1923 = vadd.f32 %v1789, %v1917
      %1924 = vst [vmem:[%s199] sm:$0xff] %v1920
      %1925 = vst [vmem:[%s199 + $0x8] sm:$0xff] %v1921
      %1926 = vst [vmem:[%s199 + $0x10] sm:$0xff] %v1922
      %1927 = vst [vmem:[%s199 + $0x18] sm:$0xff] %v1923
      %v1928 = vadd.f32 %v1920, %v1921
      %v1929 = vadd.f32 %v1928, %v1922
      %v1930 = vadd.f32 %v1929, %v1923
      %v1931 = vrot.slane %v1930, 4
      %v1932 = vadd.f32 %v1930, %v1931
      %v1933 = vrot.slane %v1932, 2
      %v1934 = vadd.f32 %v1932, %v1933
      %v1935 = vrot.slane %v1934, 1
      %v1936 = vadd.f32 %v1934, %v1935
      %v1937 = vmul.f32 %v1920, %v1920
      %v1938 = vmul.f32 %v1921, %v1921
      %v1939 = vmul.f32 %v1922, %v1922
      %v1940 = vmul.f32 %v1923, %v1923
      %v1941 = vadd.f32 %v1937, %v1938
      %v1942 = vadd.f32 %v1941, %v1939
      %v1943 = vadd.f32 %v1942, %v1940
      %v1944 = vrot.slane %v1943, 4
      %v1945 = vadd.f32 %v1943, %v1944
      %v1946 = vrot.slane %v1945, 2
      %v1947 = vadd.f32 %v1945, %v1946
      %v1948 = vrot.slane %v1947, 1
      %v1949 = vadd.f32 %v1947, %v1948
      %vm1950 = vcmask 1040384
      %v1951 = vsel %vm1950, %v1936, %v1949
      %p1952 = scmp.eq.s32.totalorder %s20, 0
      // Predicated region
      $region29: #{conv_block.2} parent=27 // pred_check
        %p1953 = pneg %p1952
      $region30: #{conv_block.2} parent=27 // pred_check_branch
        %1955 = sbr.rel (%p1953) target = $region32
      $region31: #{conv_block.2} parent=27 // pred_region
        %1956 = vst [vmem:[%s204] sm:$0x3] 0.0
      $region32: #{conv_block.2} parent=27 // pred_fallthru
        _
      %v1957 = vld [vmem:[%s204] sm:$0x3]
      %v1958 = vadd.f32 %v1957, %v1951
      %1959 = vst [vmem:[%s204] sm:$0x3] %v1958
      %s1960 = smul.u32 4, %s20
      %p1961 = scmp.lt.s32.totalorder %s19, 1
      %s1962 = scalar_select %p1961, %s19, 1
      %p1963 = scmp.lt.s32.totalorder %s1960, 7
      %s1964 = scalar_select %p1963, %s1960, 7
      %s1965 = smul.addr %s1962, 8
      %s1966 = sadd.s32 %s1964, %s1965
      %s1967 = smul.addr %s1966, 8
      %s1968 = scalar_lea.vmem %s2, %s1967
      %p1969 = scmp.lt.s32.totalorder %s19, 1
      %s1970 = scalar_select %p1969, %s19, 1
      %s1971 = smul.addr %s1970, 2
      %s1972 = scalar_lea.vmem %s3, %s1971
      // Predicated region
      $region33: #{conv_block.2} parent=27 // pred_check
        %p1973 = pneg %p94
      $region34: #{conv_block.2} parent=27 // pred_check_branch
        %1975 = sbr.rel (%p1973) target = $region36
      $region35: #{conv_block.2} parent=27 // pred_region
        %s1976 = smul.u32 4, %s20
      $region36: #{conv_block.2} parent=27 // pred_fallthru
        _
      // Predicated region
      $region37: #{conv_block.2} parent=27 // pred_check
        %p1977 = pneg %p120
      $region38: #{conv_block.2} parent=27 // pred_check_branch
        %1979 = sbr.rel (%p1977) target = $region40
      $region39: #{conv_block.2} parent=27 // pred_region
        _
      $region40: #{conv_block.2} parent=27 // pred_fallthru
        _
    $region28: #{conv_block.2} parent=5 // pred_fallthru
      _
    %p1980 = scmp.le.s32.totalorder 2, %s10
    // Predicated region
    $region41: #{conv_block.2} parent=5 // pred_check
      %p1981 = pneg %p1980
    $region42: #{conv_block.2} parent=5 // pred_check_branch
      %1983 = sbr.rel (%p1981) target = $region44
    $region43: #{conv_block.2} parent=5 // pred_region
      %s1984 = ssub.s32 %s10, 2
      // Predicated region
      $region45: #{conv_block.2} parent=43 // pred_check
        %p1985 = pneg %p100
      $region46: #{conv_block.2} parent=43 // pred_check_branch
        %1987 = sbr.rel (%p1985) target = $region48
      $region47: #{conv_block.2} parent=43 // pred_region
        %s1988 = smul.u32 4, %s22
        %p1989 = scmp.lt.s32.totalorder %s21, 1
        %s1990 = scalar_select %p1989, %s21, 1
        %p1991 = scmp.lt.s32.totalorder %s1988, 7
        %s1992 = scalar_select %p1991, %s1988, 7
        %s1993 = smul.addr %s1990, 8
        %s1994 = sadd.s32 %s1992, %s1993
        %s1995 = smul.addr %s1994, 8
        %s1996 = scalar_lea.vmem %s2, %s1995
      $region48: #{conv_block.2} parent=43 // pred_fallthru
        _
      // Predicated region
      $region49: #{conv_block.2} parent=43 // pred_check
        %p1997 = pneg %p126
      $region50: #{conv_block.2} parent=43 // pred_check_branch
        %1999 = sbr.rel (%p1997) target = $region52
      $region51: #{conv_block.2} parent=43 // pred_region
        %p2000 = scmp.lt.s32.totalorder %s21, 1
        %s2001 = scalar_select %p2000, %s21, 1
        %s2002 = smul.addr %s2001, 2
        %s2003 = scalar_lea.vmem %s3, %s2002
      $region52: #{conv_block.2} parent=43 // pred_fallthru
        _
    $region44: #{conv_block.2} parent=5 // pred_fallthru
      _
  $region6: #{conv_block.2} parent=0 // loop_footer
    %s14 = sadd.s32 1, %s10
  $region7: #{conv_block.2} parent=0 // loop_footer_branch
    %9 = sbr.rel target = $region3
  $region8: #{conv_block.2} parent=0 // loop_exit
    _

</llo_original>
